<compile_context>
chip_gen: v7x
topology: tpu7x:2x2x1
jax: 0.10.0
libtpu: 0.0.40
codegen_flags: <defaults>
</compile_context>

<pallas_src>
import functools

import jax
import jax.numpy as jnp
from jax.experimental import pallas as pl
from jax.experimental.pallas import tpu as pltpu

NEG_INF = -1e30   # finite "minus infinity" so masked-tile logsumexp never produces inf-inf NaNs


def _resident_spec(shape):
    """VMEM-resident input (constant index map). Single-buffered when supported,
    which halves the resident footprint (matters for v7x's 64 MiB VMEM)."""
    zeros = (0,) * len(shape)
    index_map = lambda c, j, tok: zeros
    buffered = getattr(pl, "Buffered", None)
    if buffered is not None:
        try:
            return pl.BlockSpec(shape, index_map, pipeline_mode=buffered(1))
        except TypeError:
            pass
    return pl.BlockSpec(shape, index_map)


def attn_decoder_kernel(
    # --- scalar prefetch (SMEM) ---
    tok_ref,            # (1,) int32 : consumed by the embedding index_map; unused here
    # --- inputs (VMEM) ---
    emb_ref,            # (1, 1, H) bf16 : gathered embedding row
    hid_ref,            # (1, H)    f32  : previous hidden state
    enc_ref,            # (L, H)    f32  : encoder outputs
    w_ae_ref, w_ah_ref, b_a_ref,           # attn Linear(2H->L), split halves (bf16/bf16/f32)
    w_ce_ref, w_ca_ref, b_c_ref,           # attn_combine Linear(2H->H), split halves
    w_ir_ref, w_iz_ref, w_in_ref,          # GRU input weights, per gate (H, H) bf16
    w_hr_ref, w_hz_ref, w_hn_ref,          # GRU hidden weights, per gate (H, H) bf16
    b_r_ref, b_z_ref, b_in_ref, b_hn_ref,  # GRU biases (r/z folded, n split) f32
    w_out_ref, b_out_ref,                  # streamed V-tile: (H, tV) bf16, (1, tV) f32
    # --- outputs ---
    logits_ref,         # (1, 1, tV) f32 : raw logits for this vocab tile
    hnew_ref,           # (1, 1, H)  f32 : new hidden (per core copy)
    attnw_ref,          # (1, 1, L)  f32 : attention weights (per core copy)
    m_ref, s_ref,       # (1, 1, 1)  f32 : per-core running max / sum-exp (partial LSE)
    *, V, tV, n_tiles_pc, V_pad,
):
    f32 = jnp.float32
    bf16 = jnp.bfloat16
    c = pl.program_id(0)                 # vocab half (one per TensorCore on v7x)
    j = pl.program_id(1)                 # vocab tile within the half

    # ------- attention + combine + GRU step: once per core (tile 0) -------
    @pl.when(j == 0)
    def _():
        emb = emb_ref[0]                              # (1, H) bf16 embedded token row
        hid = hid_ref[...]                            # (1, H) f32
        hid_bf = hid.astype(bf16)

        # attn_weights = softmax(attn(cat(embedded, hidden)))
        a_logits = (
            jnp.dot(emb, w_ae_ref[...], preferred_element_type=f32)
            + jnp.dot(hid_bf, w_ah_ref[...], preferred_element_type=f32)
            + b_a_ref[...])                           # (1, L)
        a_max = jnp.max(a_logits, axis=1, keepdims=True)
        a_exp = jnp.exp(a_logits - a_max)
        attn_w = a_exp / jnp.sum(a_exp, axis=1, keepdims=True)   # exact softmax (off hot path)
        attnw_ref[0] = attn_w

        # attn_applied = attn_weights @ encoder_outputs
        applied = jnp.dot(attn_w, enc_ref[...], preferred_element_type=f32)   # (1, H)

        # output = relu(attn_combine(cat(embedded, attn_applied)))
        x = (jnp.dot(emb, w_ce_ref[...], preferred_element_type=f32)
             + jnp.dot(applied.astype(bf16), w_ca_ref[...], preferred_element_type=f32)
             + b_c_ref[...])
        x = jnp.maximum(x, 0.0)                       # (1, H)
        x_bf = x.astype(bf16)

        # single GRU step (PyTorch gate order r, z, n)
        r = jax.nn.sigmoid(
            jnp.dot(x_bf, w_ir_ref[...], preferred_element_type=f32)
            + jnp.dot(hid_bf, w_hr_ref[...], preferred_element_type=f32)
            + b_r_ref[...])
        z = jax.nn.sigmoid(
            jnp.dot(x_bf, w_iz_ref[...], preferred_element_type=f32)
            + jnp.dot(hid_bf, w_hz_ref[...], preferred_element_type=f32)
            + b_z_ref[...])
        n = jnp.tanh(
            jnp.dot(x_bf, w_in_ref[...], preferred_element_type=f32)
            + b_in_ref[...]
            + r * (jnp.dot(hid_bf, w_hn_ref[...], preferred_element_type=f32)
                   + b_hn_ref[...]))
        h_new = (1.0 - z) * n + z * hid               # (1, H) f32

        hnew_ref[0] = h_new
        m_ref[0] = jnp.full((1, 1), NEG_INF, f32)
        s_ref[0] = jnp.zeros((1, 1), f32)

    # ------- streamed output projection + per-core online logsumexp (every tile) -------
    h_bf = hnew_ref[0].astype(bf16)                   # (1, H) bf16 straight to the MXU
    logits = (jnp.dot(h_bf, w_out_ref[...], preferred_element_type=f32)
              + b_out_ref[...])                       # (1, tV) f32
    # Raw logits are stored unmasked; padded vocab columns are sliced off by the wrapper.
    logits_ref[0] = logits

    def lse_update(lg):
        m_old = m_ref[0]
        m_new = jnp.maximum(m_old, jnp.max(lg, axis=1, keepdims=True))
        s_ref[0] = (s_ref[0] * jnp.exp(m_old - m_new)
                    + jnp.sum(jnp.exp(lg - m_new), axis=1, keepdims=True))
        m_ref[0] = m_new

    g = c * n_tiles_pc + j               # global vocab-tile index
    n_full = V // tV                     # number of tiles with no padded columns
    if V_pad == V:
        lse_update(logits)               # no padding anywhere: hot loop stays mask-free
    else:
        @pl.when(g < n_full)             # hot path: fully valid tiles, no mask work
        def _():
            lse_update(logits)

        @pl.when(g >= n_full)            # padded tiles only (last tile / all-padded tiles)
        def _():
            col = g * tV + jax.lax.broadcasted_iota(jnp.int32, (1, tV), 1)
            lse_update(jnp.where(col < V, logits, NEG_INF))


def prepare_params(params):
    """One-time prep: pad/reshape weights for the kernel (hoisted out of the per-token call)."""
    V, H = params["embedding"].shape
    L = params["b_attn"].shape[1]

    tV = min(2048, pl.cdiv(V, 128) * 128)      # lane-dense vocab tile (2048 per perf review)
    n_tiles = pl.cdiv(V, tV)
    n_tiles_pc = pl.cdiv(n_tiles, 2)           # vocab tiles per TensorCore (v7x: 2 TCs)
    V_pad = 2 * n_tiles_pc * tV

    prep = dict(params)
    prep["embedding3"] = params["embedding"].reshape(V, 1, H)     # row-gather-friendly layout
    prep["w_out_p"] = jnp.pad(params["w_out"], ((0, 0), (0, V_pad - V)))
    prep["b_out_p"] = jnp.pad(params["b_out"], ((0, 0), (0, V_pad - V)))
    prep["_static"] = dict(H=H, V=V, L=L, tV=tV, n_tiles_pc=n_tiles_pc, V_pad=V_pad)
    return prep


def attn_decoder_forward(token, hidden, encoder_outputs, prep):
    """token: (1,) int; hidden: (1,1,H); encoder_outputs: (L,H). Returns (logp, hidden, attn_w)."""
    st = prep["_static"]
    H, V, L = st["H"], st["V"], st["L"]
    tV, n_tiles_pc, V_pad = st["tV"], st["n_tiles_pc"], st["V_pad"]

    # clamp token index (no runtime OOB checks on HBM row gathers); tiny scalar op
    tok = jnp.clip(token.astype(jnp.int32), 0, V - 1).reshape(1)
    hid2 = hidden.reshape(1, H).astype(jnp.float32)
    enc = encoder_outputs.astype(jnp.float32)

    kernel = functools.partial(attn_decoder_kernel, V=V, tV=tV,
                               n_tiles_pc=n_tiles_pc, V_pad=V_pad)

    grid_spec = pltpu.PrefetchScalarGridSpec(
        num_scalar_prefetch=1,
        grid=(2, n_tiles_pc),                 # (vocab half / TensorCore, vocab tile)
        in_specs=[
            # embedding: gather only the selected row
            pl.BlockSpec((1, 1, H), lambda c, j, tok: (tok[0], 0, 0)),
            _resident_spec((1, H)),           # hidden
            _resident_spec((L, H)),           # encoder outputs
            _resident_spec((H, L)),           # w_attn (embedded half)
            _resident_spec((H, L)),           # w_attn (hidden half)
            _resident_spec((1, L)),           # b_attn
            _resident_spec((H, H)),           # w_comb (embedded half)
            _resident_spec((H, H)),           # w_comb (applied half)
            _resident_spec((1, H)),           # b_comb
            _resident_spec((H, H)),           # w_ir
            _resident_spec((H, H)),           # w_iz
            _resident_spec((H, H)),           # w_in
            _resident_spec((H, H)),           # w_hr
            _resident_spec((H, H)),           # w_hz
            _resident_spec((H, H)),           # w_hn
            _resident_spec((1, H)),           # b_r
            _resident_spec((1, H)),           # b_z
            _resident_spec((1, H)),           # b_in
            _resident_spec((1, H)),           # b_hn
            # output projection streams per vocab tile (double-buffered by Pallas)
            pl.BlockSpec((H, tV), lambda c, j, tok: (0, c * n_tiles_pc + j)),
            pl.BlockSpec((1, tV), lambda c, j, tok: (0, c * n_tiles_pc + j)),
        ],
        out_specs=[
            pl.BlockSpec((1, 1, tV), lambda c, j, tok: (c * n_tiles_pc + j, 0, 0)),  # raw logits
            pl.BlockSpec((1, 1, H), lambda c, j, tok: (c, 0, 0)),   # new hidden (per core)
            pl.BlockSpec((1, 1, L), lambda c, j, tok: (c, 0, 0)),   # attention weights (per core)
            pl.BlockSpec((1, 1, 1), lambda c, j, tok: (c, 0, 0)),   # partial LSE: running max
            pl.BlockSpec((1, 1, 1), lambda c, j, tok: (c, 0, 0)),   # partial LSE: running sumexp
        ],
    )

    logits_t, hnew, attnw, m_part, s_part = pl.pallas_call(
        kernel,
        out_shape=(
            jax.ShapeDtypeStruct((2 * n_tiles_pc, 1, tV), jnp.float32),
            jax.ShapeDtypeStruct((2, 1, H), jnp.float32),
            jax.ShapeDtypeStruct((2, 1, L), jnp.float32),
            jax.ShapeDtypeStruct((2, 1, 1), jnp.float32),
            jax.ShapeDtypeStruct((2, 1, 1), jnp.float32),
        ),
        grid_spec=grid_spec,
        compiler_params=pltpu.CompilerParams(
            dimension_semantics=("parallel", "arbitrary"),   # vocab halves across v7x cores
            vmem_limit_bytes=48 * 1024 * 1024,               # sized for tV=2048; < v7x 64 MiB
        ),
    )(tok, prep["embedding3"], hid2, enc,
      prep["w_attn_e"], prep["w_attn_h"], prep["b_attn"],
      prep["w_comb_e"], prep["w_comb_a"], prep["b_comb"],
      prep["w_ir"], prep["w_iz"], prep["w_in"],
      prep["w_hr"], prep["w_hz"], prep["w_hn"],
      prep["b_r"], prep["b_z"], prep["b_in"], prep["b_hn"],
      prep["w_out_p"], prep["b_out_p"])

    # Combine the two per-core partial logsumexps and normalize (tiny (1, V) epilogue).
    m0, s0 = m_part[0, 0, 0], s_part[0, 0, 0]
    m1, s1 = m_part[1, 0, 0], s_part[1, 0, 0]
    m = jnp.maximum(m0, m1)
    lse = m + jnp.log(s0 * jnp.exp(m0 - m) + s1 * jnp.exp(m1 - m))

    logp = logits_t.reshape(1, V_pad)[:, :V] - lse         # padded columns sliced off here
    h_new = hnew[0].reshape(1, 1, H)                       # both cores hold identical states
    attn_w = attnw[0]                                      # (1, L)
    return logp, h_new, attn_w


def init_params(key, hidden_size, output_size, max_length):
    H, V, L = hidden_size, output_size, max_length
    ks = jax.random.split(key, 20)
    bf16 = jnp.bfloat16

    def u(k, shape, scale):
        return jax.random.uniform(k, shape, jnp.float32, minval=-scale, maxval=scale)

    s2h = (2 * H) ** -0.5
    sh = H ** -0.5
    return {
        # nn.Embedding(V, H) -- bf16 to halve HBM traffic
        "embedding": jax.random.normal(ks[0], (V, H), jnp.float32).astype(bf16),
        # nn.Linear(2H -> L): stored as two (H, L) halves (embedded / hidden)
        "w_attn_e": u(ks[1], (H, L), s2h).astype(bf16),
        "w_attn_h": u(ks[2], (H, L), s2h).astype(bf16),
        "b_attn":   u(ks[3], (1, L), s2h),
        # nn.Linear(2H -> H): stored as two (H, H) halves (embedded / attn_applied)
        "w_comb_e": u(ks[4], (H, H), s2h).astype(bf16),
        "w_comb_a": u(ks[5], (H, H), s2h).astype(bf16),
        "b_comb":   u(ks[6], (1, H), s2h),
        # nn.GRU(H, H): per-gate weights, stored (in_features, out_features)
        "w_ir": u(ks[7], (H, H), sh).astype(bf16),
        "w_iz": u(ks[8], (H, H), sh).astype(bf16),
        "w_in": u(ks[9], (H, H), sh).astype(bf16),
        "w_hr": u(ks[10], (H, H), sh).astype(bf16),
        "w_hz": u(ks[11], (H, H), sh).astype(bf16),
        "w_hn": u(ks[12], (H, H), sh).astype(bf16),
        "b_r":  u(ks[13], (1, H), sh),   # b_ir + b_hr folded
        "b_z":  u(ks[14], (1, H), sh),   # b_iz + b_hz folded
        "b_in": u(ks[15], (1, H), sh),
        "b_hn": u(ks[16], (1, H), sh),
        # nn.Linear(H -> V)
        "w_out": u(ks[17], (H, V), sh).astype(bf16),
        "b_out": u(ks[18], (1, V), sh),
    }


def reference_forward(token, hidden, encoder_outputs, p):
    """Pure-JAX reference mirroring the PyTorch forward (eval mode), same params."""
    f32 = jnp.float32
    H = hidden.shape[-1]
    emb = p["embedding"].astype(f32)[token[0]][None, :]
    hid = hidden.reshape(1, H).astype(f32)
    logits = emb @ p["w_attn_e"].astype(f32) + hid @ p["w_attn_h"].astype(f32) + p["b_attn"]
    attn_w = jax.nn.softmax(logits, axis=1)
    applied = attn_w @ encoder_outputs.astype(f32)
    x = emb @ p["w_comb_e"].astype(f32) + applied @ p["w_comb_a"].astype(f32) + p["b_comb"]
    x = jnp.maximum(x, 0.0)
    r = jax.nn.sigmoid(x @ p["w_ir"].astype(f32) + hid @ p["w_hr"].astype(f32) + p["b_r"])
    z = jax.nn.sigmoid(x @ p["w_iz"].astype(f32) + hid @ p["w_hz"].astype(f32) + p["b_z"])
    n = jnp.tanh(x @ p["w_in"].astype(f32) + p["b_in"]
                 + r * (hid @ p["w_hn"].astype(f32) + p["b_hn"]))
    h_new = (1.0 - z) * n + z * hid
    logp = jax.nn.log_softmax(h_new @ p["w_out"].astype(f32) + p["b_out"], axis=1)
    return logp, h_new.reshape(1, 1, H), attn_w


if __name__ == "__main__":
    hidden_size = 32
    output_size = 16
    max_length = 10

    key = jax.random.PRNGKey(0)
    kp, kh, ke = jax.random.split(key, 3)
    params = init_params(kp, hidden_size, output_size, max_length)
    prep = prepare_params(params)        # one-time weight prep (hoisted out of the hot path)

    token = jnp.array([3], dtype=jnp.int32)
    hidden = jax.random.normal(kh, (1, 1, hidden_size), jnp.float32)
    encoder_outputs = jax.random.normal(ke, (max_length, hidden_size), jnp.float32)

    logp, h_new, attn_w = attn_decoder_forward(token, hidden, encoder_outputs, prep)
    jax.block_until_ready((logp, h_new, attn_w))

    # sanity check vs pure-JAX reference (same bf16 weights)
    r_logp, r_h, r_aw = reference_forward(token, hidden, encoder_outputs, params)
    assert jnp.allclose(attn_w, r_aw, atol=1e-2), "attn weights mismatch"
    assert jnp.allclose(h_new, r_h, atol=1e-2), "hidden mismatch"
    assert jnp.allclose(logp, r_logp, atol=1e-2), "log-prob mismatch"

    assert logp.shape == (1, output_size)
    assert h_new.shape == (1, 1, hidden_size)
    assert attn_w.shape == (1, max_length)
    print("KERNEL_OK")
</pallas_src>

<mosaic_0001>
module attributes {stable_mosaic.version = 11 : i64} {
  func.func @attn_decoder_kernel(%arg0: i32, %arg1: i32, %arg2: memref<1xi32, #tpu.memory_space<smem>>, %arg3: memref<1x1x32xbf16, #tpu.memory_space<vmem>>, %arg4: memref<1x32xf32, #tpu.memory_space<vmem>>, %arg5: memref<10x32xf32, #tpu.memory_space<vmem>>, %arg6: memref<32x10xbf16, #tpu.memory_space<vmem>>, %arg7: memref<32x10xbf16, #tpu.memory_space<vmem>>, %arg8: memref<1x10xf32, #tpu.memory_space<vmem>>, %arg9: memref<32x32xbf16, #tpu.memory_space<vmem>>, %arg10: memref<32x32xbf16, #tpu.memory_space<vmem>>, %arg11: memref<1x32xf32, #tpu.memory_space<vmem>>, %arg12: memref<32x32xbf16, #tpu.memory_space<vmem>>, %arg13: memref<32x32xbf16, #tpu.memory_space<vmem>>, %arg14: memref<32x32xbf16, #tpu.memory_space<vmem>>, %arg15: memref<32x32xbf16, #tpu.memory_space<vmem>>, %arg16: memref<32x32xbf16, #tpu.memory_space<vmem>>, %arg17: memref<32x32xbf16, #tpu.memory_space<vmem>>, %arg18: memref<1x32xf32, #tpu.memory_space<vmem>>, %arg19: memref<1x32xf32, #tpu.memory_space<vmem>>, %arg20: memref<1x32xf32, #tpu.memory_space<vmem>>, %arg21: memref<1x32xf32, #tpu.memory_space<vmem>>, %arg22: memref<32x128xbf16, #tpu.memory_space<vmem>>, %arg23: memref<1x128xf32, #tpu.memory_space<vmem>>, %arg24: memref<1x1x128xf32, #tpu.memory_space<vmem>>, %arg25: memref<1x1x32xf32, #tpu.memory_space<vmem>>, %arg26: memref<1x1x10xf32, #tpu.memory_space<vmem>>, %arg27: memref<1x1x1xf32, #tpu.memory_space<vmem>>, %arg28: memref<1x1x1xf32, #tpu.memory_space<vmem>>) attributes {dimension_semantics = [#tpu.dimension_semantics<parallel>, #tpu.dimension_semantics<arbitrary>], iteration_bounds = array<i64: 2, 1>, scalar_prefetch = 1 : i64, scratch_operands = 0 : i64, tpu.core_type = #tpu.core_type<tc>, window_params = [{transform_indices = @transform_0, window_bounds = array<i64: 1, 1, 32>}, {pipeline_mode = #tpu.pipeline_mode<synchronous>, transform_indices = @transform_1, window_bounds = array<i64: 1, 32>}, {pipeline_mode = #tpu.pipeline_mode<synchronous>, transform_indices = @transform_2, window_bounds = array<i64: 10, 32>}, {pipeline_mode = #tpu.pipeline_mode<synchronous>, transform_indices = @transform_3, window_bounds = array<i64: 32, 10>}, {pipeline_mode = #tpu.pipeline_mode<synchronous>, transform_indices = @transform_4, window_bounds = array<i64: 32, 10>}, {pipeline_mode = #tpu.pipeline_mode<synchronous>, transform_indices = @transform_5, window_bounds = array<i64: 1, 10>}, {pipeline_mode = #tpu.pipeline_mode<synchronous>, transform_indices = @transform_6, window_bounds = array<i64: 32, 32>}, {pipeline_mode = #tpu.pipeline_mode<synchronous>, transform_indices = @transform_7, window_bounds = array<i64: 32, 32>}, {pipeline_mode = #tpu.pipeline_mode<synchronous>, transform_indices = @transform_8, window_bounds = array<i64: 1, 32>}, {pipeline_mode = #tpu.pipeline_mode<synchronous>, transform_indices = @transform_9, window_bounds = array<i64: 32, 32>}, {pipeline_mode = #tpu.pipeline_mode<synchronous>, transform_indices = @transform_10, window_bounds = array<i64: 32, 32>}, {pipeline_mode = #tpu.pipeline_mode<synchronous>, transform_indices = @transform_11, window_bounds = array<i64: 32, 32>}, {pipeline_mode = #tpu.pipeline_mode<synchronous>, transform_indices = @transform_12, window_bounds = array<i64: 32, 32>}, {pipeline_mode = #tpu.pipeline_mode<synchronous>, transform_indices = @transform_13, window_bounds = array<i64: 32, 32>}, {pipeline_mode = #tpu.pipeline_mode<synchronous>, transform_indices = @transform_14, window_bounds = array<i64: 32, 32>}, {pipeline_mode = #tpu.pipeline_mode<synchronous>, transform_indices = @transform_15, window_bounds = array<i64: 1, 32>}, {pipeline_mode = #tpu.pipeline_mode<synchronous>, transform_indices = @transform_16, window_bounds = array<i64: 1, 32>}, {pipeline_mode = #tpu.pipeline_mode<synchronous>, transform_indices = @transform_17, window_bounds = array<i64: 1, 32>}, {pipeline_mode = #tpu.pipeline_mode<synchronous>, transform_indices = @transform_18, window_bounds = array<i64: 1, 32>}, {transform_indices = @transform_19, window_bounds = array<i64: 32, 128>}, {transform_indices = @transform_20, window_bounds = array<i64: 1, 128>}, {transform_indices = @transform_21, window_bounds = array<i64: 1, 1, 128>}, {transform_indices = @transform_22, window_bounds = array<i64: 1, 1, 32>}, {transform_indices = @transform_23, window_bounds = array<i64: 1, 1, 10>}, {transform_indices = @transform_24, window_bounds = array<i64: 1, 1, 1>}, {transform_indices = @transform_25, window_bounds = array<i64: 1, 1, 1>}]} {
    %c0_i32 = arith.constant 0 : i32
    %0 = arith.cmpi eq, %arg1, %c0_i32 : i32
    %1 = arith.extui %0 : i1 to i32
    %c0_i32_0 = arith.constant 0 : i32
    %2 = arith.cmpi ne, %1, %c0_i32_0 : i32
    scf.if %2 {
      %c0_14 = arith.constant 0 : index
      %c0_15 = arith.constant 0 : index
      %c0_16 = arith.constant 0 : index
      %21 = vector.load %arg3[%c0_14, %c0_15, %c0_16] : memref<1x1x32xbf16, #tpu.memory_space<vmem>>, vector<1x1x32xbf16>
      %22 = vector.shape_cast %21 : vector<1x1x32xbf16> to vector<1x32xbf16>
      %c0_17 = arith.constant 0 : index
      %c0_18 = arith.constant 0 : index
      %23 = vector.load %arg4[%c0_17, %c0_18] : memref<1x32xf32, #tpu.memory_space<vmem>>, vector<1x32xf32>
      %24 = arith.truncf %23 : vector<1x32xf32> to vector<1x32xbf16>
      %c0_19 = arith.constant 0 : index
      %c0_20 = arith.constant 0 : index
      %25 = vector.load %arg6[%c0_19, %c0_20] : memref<32x10xbf16, #tpu.memory_space<vmem>>, vector<32x10xbf16>
      %cst_21 = arith.constant dense<0.000000e+00> : vector<1x10xf32>
      %26 = tpu.matmul %22, %25, %cst_21 {dimension_numbers = #tpu.dot_dimension_numbers<[1], [0], [0], [1], [0, 0, 1, 1], [], []>} : vector<1x32xbf16>, vector<32x10xbf16>, vector<1x10xf32> -> vector<1x10xf32>
      %c0_22 = arith.constant 0 : index
      %c0_23 = arith.constant 0 : index
      %27 = vector.load %arg7[%c0_22, %c0_23] : memref<32x10xbf16, #tpu.memory_space<vmem>>, vector<32x10xbf16>
      %cst_24 = arith.constant dense<0.000000e+00> : vector<1x10xf32>
      %28 = tpu.matmul %24, %27, %cst_24 {dimension_numbers = #tpu.dot_dimension_numbers<[1], [0], [0], [1], [0, 0, 1, 1], [], []>} : vector<1x32xbf16>, vector<32x10xbf16>, vector<1x10xf32> -> vector<1x10xf32>
      %29 = arith.addf %26, %28 : vector<1x10xf32>
      %c0_25 = arith.constant 0 : index
      %c0_26 = arith.constant 0 : index
      %30 = vector.load %arg8[%c0_25, %c0_26] : memref<1x10xf32, #tpu.memory_space<vmem>>, vector<1x10xf32>
      %31 = arith.addf %29, %30 : vector<1x10xf32>
      %cst_27 = arith.constant dense<0xFF800000> : vector<1xf32>
      %32 = vector.multi_reduction <maximumf>, %31, %cst_27 [1] : vector<1x10xf32> to vector<1xf32>
      %33 = vector.shape_cast %32 : vector<1xf32> to vector<1x1xf32>
      %34 = vector.broadcast %33 : vector<1x1xf32> to vector<1x10xf32>
      %35 = arith.subf %31, %34 : vector<1x10xf32>
      %36 = math.exp %35 : vector<1x10xf32>
      %cst_28 = arith.constant dense<0.000000e+00> : vector<1xf32>
      %37 = vector.multi_reduction <add>, %36, %cst_28 [1] : vector<1x10xf32> to vector<1xf32>
      %38 = vector.shape_cast %37 : vector<1xf32> to vector<1x1xf32>
      %39 = vector.broadcast %38 : vector<1x1xf32> to vector<1x10xf32>
      %40 = arith.divf %36, %39 : vector<1x10xf32>
      %c0_29 = arith.constant 0 : index
      %c0_30 = arith.constant 0 : index
      %c0_31 = arith.constant 0 : index
      %41 = vector.load %arg26[%c0_29, %c0_30, %c0_31] : memref<1x1x10xf32, #tpu.memory_space<vmem>>, vector<1x1x10xf32>
      %42 = vector.shape_cast %41 : vector<1x1x10xf32> to vector<1x10xf32>
      %43 = vector.shape_cast %40 : vector<1x10xf32> to vector<1x1x10xf32>
      tpu.vector_store %arg26[%c0_29, %c0_30, %c0_31], %43 {strides = array<i32>} : memref<1x1x10xf32, #tpu.memory_space<vmem>>, vector<1x1x10xf32>,
      %c0_32 = arith.constant 0 : index
      %c0_33 = arith.constant 0 : index
      %44 = vector.load %arg5[%c0_32, %c0_33] : memref<10x32xf32, #tpu.memory_space<vmem>>, vector<10x32xf32>
      %cst_34 = arith.constant dense<0.000000e+00> : vector<1x32xf32>
      %45 = tpu.matmul %40, %44, %cst_34 {dimension_numbers = #tpu.dot_dimension_numbers<[1], [0], [0], [1], [0, 0, 1, 1], [], []>} : vector<1x10xf32>, vector<10x32xf32>, vector<1x32xf32> -> vector<1x32xf32>
      %c0_35 = arith.constant 0 : index
      %c0_36 = arith.constant 0 : index
      %46 = vector.load %arg9[%c0_35, %c0_36] : memref<32x32xbf16, #tpu.memory_space<vmem>>, vector<32x32xbf16>
      %cst_37 = arith.constant dense<0.000000e+00> : vector<1x32xf32>
      %47 = tpu.matmul %22, %46, %cst_37 {dimension_numbers = #tpu.dot_dimension_numbers<[1], [0], [0], [1], [0, 0, 1, 1], [], []>} : vector<1x32xbf16>, vector<32x32xbf16>, vector<1x32xf32> -> vector<1x32xf32>
      %48 = arith.truncf %45 : vector<1x32xf32> to vector<1x32xbf16>
      %c0_38 = arith.constant 0 : index
      %c0_39 = arith.constant 0 : index
      %49 = vector.load %arg10[%c0_38, %c0_39] : memref<32x32xbf16, #tpu.memory_space<vmem>>, vector<32x32xbf16>
      %cst_40 = arith.constant dense<0.000000e+00> : vector<1x32xf32>
      %50 = tpu.matmul %48, %49, %cst_40 {dimension_numbers = #tpu.dot_dimension_numbers<[1], [0], [0], [1], [0, 0, 1, 1], [], []>} : vector<1x32xbf16>, vector<32x32xbf16>, vector<1x32xf32> -> vector<1x32xf32>
      %51 = arith.addf %47, %50 : vector<1x32xf32>
      %c0_41 = arith.constant 0 : index
      %c0_42 = arith.constant 0 : index
      %52 = vector.load %arg11[%c0_41, %c0_42] : memref<1x32xf32, #tpu.memory_space<vmem>>, vector<1x32xf32>
      %53 = arith.addf %51, %52 : vector<1x32xf32>
      %cst_43 = arith.constant 0.000000e+00 : f32
      %54 = vector.broadcast %cst_43 : f32 to vector<1x32xf32>
      %55 = arith.maximumf %53, %54 : vector<1x32xf32>
      %56 = arith.truncf %55 : vector<1x32xf32> to vector<1x32xbf16>
      %c0_44 = arith.constant 0 : index
      %c0_45 = arith.constant 0 : index
      %57 = vector.load %arg12[%c0_44, %c0_45] : memref<32x32xbf16, #tpu.memory_space<vmem>>, vector<32x32xbf16>
      %cst_46 = arith.constant dense<0.000000e+00> : vector<1x32xf32>
      %58 = tpu.matmul %56, %57, %cst_46 {dimension_numbers = #tpu.dot_dimension_numbers<[1], [0], [0], [1], [0, 0, 1, 1], [], []>} : vector<1x32xbf16>, vector<32x32xbf16>, vector<1x32xf32> -> vector<1x32xf32>
      %c0_47 = arith.constant 0 : index
      %c0_48 = arith.constant 0 : index
      %59 = vector.load %arg15[%c0_47, %c0_48] : memref<32x32xbf16, #tpu.memory_space<vmem>>, vector<32x32xbf16>
      %cst_49 = arith.constant dense<0.000000e+00> : vector<1x32xf32>
      %60 = tpu.matmul %24, %59, %cst_49 {dimension_numbers = #tpu.dot_dimension_numbers<[1], [0], [0], [1], [0, 0, 1, 1], [], []>} : vector<1x32xbf16>, vector<32x32xbf16>, vector<1x32xf32> -> vector<1x32xf32>
      %61 = arith.addf %58, %60 : vector<1x32xf32>
      %c0_50 = arith.constant 0 : index
      %c0_51 = arith.constant 0 : index
      %62 = vector.load %arg18[%c0_50, %c0_51] : memref<1x32xf32, #tpu.memory_space<vmem>>, vector<1x32xf32>
      %63 = arith.addf %61, %62 : vector<1x32xf32>
      %64 = arith.negf %63 : vector<1x32xf32>
      %65 = math.exp %64 : vector<1x32xf32>
      %cst_52 = arith.constant 1.000000e+00 : f32
      %66 = vector.broadcast %cst_52 : f32 to vector<1x32xf32>
      %67 = arith.addf %66, %65 : vector<1x32xf32>
      %68 = arith.divf %66, %67 : vector<1x32xf32>
      %c0_53 = arith.constant 0 : index
      %c0_54 = arith.constant 0 : index
      %69 = vector.load %arg13[%c0_53, %c0_54] : memref<32x32xbf16, #tpu.memory_space<vmem>>, vector<32x32xbf16>
      %cst_55 = arith.constant dense<0.000000e+00> : vector<1x32xf32>
      %70 = tpu.matmul %56, %69, %cst_55 {dimension_numbers = #tpu.dot_dimension_numbers<[1], [0], [0], [1], [0, 0, 1, 1], [], []>} : vector<1x32xbf16>, vector<32x32xbf16>, vector<1x32xf32> -> vector<1x32xf32>
      %c0_56 = arith.constant 0 : index
      %c0_57 = arith.constant 0 : index
      %71 = vector.load %arg16[%c0_56, %c0_57] : memref<32x32xbf16, #tpu.memory_space<vmem>>, vector<32x32xbf16>
      %cst_58 = arith.constant dense<0.000000e+00> : vector<1x32xf32>
      %72 = tpu.matmul %24, %71, %cst_58 {dimension_numbers = #tpu.dot_dimension_numbers<[1], [0], [0], [1], [0, 0, 1, 1], [], []>} : vector<1x32xbf16>, vector<32x32xbf16>, vector<1x32xf32> -> vector<1x32xf32>
      %73 = arith.addf %70, %72 : vector<1x32xf32>
      %c0_59 = arith.constant 0 : index
      %c0_60 = arith.constant 0 : index
      %74 = vector.load %arg19[%c0_59, %c0_60] : memref<1x32xf32, #tpu.memory_space<vmem>>, vector<1x32xf32>
      %75 = arith.addf %73, %74 : vector<1x32xf32>
      %76 = arith.negf %75 : vector<1x32xf32>
      %77 = math.exp %76 : vector<1x32xf32>
      %cst_61 = arith.constant 1.000000e+00 : f32
      %78 = vector.broadcast %cst_61 : f32 to vector<1x32xf32>
      %79 = arith.addf %78, %77 : vector<1x32xf32>
      %80 = arith.divf %78, %79 : vector<1x32xf32>
      %c0_62 = arith.constant 0 : index
      %c0_63 = arith.constant 0 : index
      %81 = vector.load %arg14[%c0_62, %c0_63] : memref<32x32xbf16, #tpu.memory_space<vmem>>, vector<32x32xbf16>
      %cst_64 = arith.constant dense<0.000000e+00> : vector<1x32xf32>
      %82 = tpu.matmul %56, %81, %cst_64 {dimension_numbers = #tpu.dot_dimension_numbers<[1], [0], [0], [1], [0, 0, 1, 1], [], []>} : vector<1x32xbf16>, vector<32x32xbf16>, vector<1x32xf32> -> vector<1x32xf32>
      %c0_65 = arith.constant 0 : index
      %c0_66 = arith.constant 0 : index
      %83 = vector.load %arg20[%c0_65, %c0_66] : memref<1x32xf32, #tpu.memory_space<vmem>>, vector<1x32xf32>
      %84 = arith.addf %82, %83 : vector<1x32xf32>
      %c0_67 = arith.constant 0 : index
      %c0_68 = arith.constant 0 : index
      %85 = vector.load %arg17[%c0_67, %c0_68] : memref<32x32xbf16, #tpu.memory_space<vmem>>, vector<32x32xbf16>
      %cst_69 = arith.constant dense<0.000000e+00> : vector<1x32xf32>
      %86 = tpu.matmul %24, %85, %cst_69 {dimension_numbers = #tpu.dot_dimension_numbers<[1], [0], [0], [1], [0, 0, 1, 1], [], []>} : vector<1x32xbf16>, vector<32x32xbf16>, vector<1x32xf32> -> vector<1x32xf32>
      %c0_70 = arith.constant 0 : index
      %c0_71 = arith.constant 0 : index
      %87 = vector.load %arg21[%c0_70, %c0_71] : memref<1x32xf32, #tpu.memory_space<vmem>>, vector<1x32xf32>
      %88 = arith.addf %86, %87 : vector<1x32xf32>
      %89 = arith.mulf %68, %88 : vector<1x32xf32>
      %90 = arith.addf %84, %89 : vector<1x32xf32>
      %91 = math.tanh %90 : vector<1x32xf32>
      %cst_72 = arith.constant 1.000000e+00 : f32
      %92 = vector.broadcast %cst_72 : f32 to vector<1x32xf32>
      %93 = arith.subf %92, %80 : vector<1x32xf32>
      %94 = arith.mulf %93, %91 : vector<1x32xf32>
      %95 = arith.mulf %80, %23 : vector<1x32xf32>
      %96 = arith.addf %94, %95 : vector<1x32xf32>
      %c0_73 = arith.constant 0 : index
      %c0_74 = arith.constant 0 : index
      %c0_75 = arith.constant 0 : index
      %97 = vector.load %arg25[%c0_73, %c0_74, %c0_75] : memref<1x1x32xf32, #tpu.memory_space<vmem>>, vector<1x1x32xf32>
      %98 = vector.shape_cast %97 : vector<1x1x32xf32> to vector<1x32xf32>
      %99 = vector.shape_cast %96 : vector<1x32xf32> to vector<1x1x32xf32>
      tpu.vector_store %arg25[%c0_73, %c0_74, %c0_75], %99 {strides = array<i32>} : memref<1x1x32xf32, #tpu.memory_space<vmem>>, vector<1x1x32xf32>,
      %cst_76 = arith.constant -1.000000e+30 : f32
      %100 = vector.broadcast %cst_76 : f32 to vector<1x1xf32>
      %c0_77 = arith.constant 0 : index
      %c0_78 = arith.constant 0 : index
      %c0_79 = arith.constant 0 : index
      %101 = vector.load %arg27[%c0_77, %c0_78, %c0_79] : memref<1x1x1xf32, #tpu.memory_space<vmem>>, vector<1x1x1xf32>
      %102 = vector.shape_cast %101 : vector<1x1x1xf32> to vector<1x1xf32>
      %103 = vector.shape_cast %100 : vector<1x1xf32> to vector<1x1x1xf32>
      tpu.vector_store %arg27[%c0_77, %c0_78, %c0_79], %103 {strides = array<i32>} : memref<1x1x1xf32, #tpu.memory_space<vmem>>, vector<1x1x1xf32>,
      %cst_80 = arith.constant 0.000000e+00 : f32
      %104 = vector.broadcast %cst_80 : f32 to vector<1x1xf32>
      %c0_81 = arith.constant 0 : index
      %c0_82 = arith.constant 0 : index
      %c0_83 = arith.constant 0 : index
      %105 = vector.load %arg28[%c0_81, %c0_82, %c0_83] : memref<1x1x1xf32, #tpu.memory_space<vmem>>, vector<1x1x1xf32>
      %106 = vector.shape_cast %105 : vector<1x1x1xf32> to vector<1x1xf32>
      %107 = vector.shape_cast %104 : vector<1x1xf32> to vector<1x1x1xf32>
      tpu.vector_store %arg28[%c0_81, %c0_82, %c0_83], %107 {strides = array<i32>} : memref<1x1x1xf32, #tpu.memory_space<vmem>>, vector<1x1x1xf32>,
    } else {
    }
    %c0 = arith.constant 0 : index
    %c0_1 = arith.constant 0 : index
    %c0_2 = arith.constant 0 : index
    %3 = vector.load %arg25[%c0, %c0_1, %c0_2] : memref<1x1x32xf32, #tpu.memory_space<vmem>>, vector<1x1x32xf32>
    %4 = vector.shape_cast %3 : vector<1x1x32xf32> to vector<1x32xf32>
    %5 = arith.truncf %4 : vector<1x32xf32> to vector<1x32xbf16>
    %c0_3 = arith.constant 0 : index
    %c0_4 = arith.constant 0 : index
    %6 = vector.load %arg22[%c0_3, %c0_4] : memref<32x128xbf16, #tpu.memory_space<vmem>>, vector<32x128xbf16>
    %cst = arith.constant dense<0.000000e+00> : vector<1x128xf32>
    %7 = tpu.matmul %5, %6, %cst {dimension_numbers = #tpu.dot_dimension_numbers<[1], [0], [0], [1], [0, 0, 1, 1], [], []>} : vector<1x32xbf16>, vector<32x128xbf16>, vector<1x128xf32> -> vector<1x128xf32>
    %c0_5 = arith.constant 0 : index
    %c0_6 = arith.constant 0 : index
    %8 = vector.load %arg23[%c0_5, %c0_6] : memref<1x128xf32, #tpu.memory_space<vmem>>, vector<1x128xf32>
    %9 = arith.addf %7, %8 : vector<1x128xf32>
    %c0_7 = arith.constant 0 : index
    %c0_8 = arith.constant 0 : index
    %c0_9 = arith.constant 0 : index
    %10 = vector.load %arg24[%c0_7, %c0_8, %c0_9] : memref<1x1x128xf32, #tpu.memory_space<vmem>>, vector<1x1x128xf32>
    %11 = vector.shape_cast %10 : vector<1x1x128xf32> to vector<1x128xf32>
    %12 = vector.shape_cast %9 : vector<1x128xf32> to vector<1x1x128xf32>
    tpu.vector_store %arg24[%c0_7, %c0_8, %c0_9], %12 {strides = array<i32>} : memref<1x1x128xf32, #tpu.memory_space<vmem>>, vector<1x1x128xf32>,
    %c1_i32 = arith.constant 1 : i32
    %13 = arith.muli %arg0, %c1_i32 : i32
    %14 = arith.addi %13, %arg1 : i32
    %c0_i32_10 = arith.constant 0 : i32
    %15 = arith.cmpi slt, %14, %c0_i32_10 : i32
    %16 = arith.extui %15 : i1 to i32
    %c0_i32_11 = arith.constant 0 : i32
    %17 = arith.cmpi ne, %16, %c0_i32_11 : i32
    scf.if %17 {
      %c0_14 = arith.constant 0 : index
      %c0_15 = arith.constant 0 : index
      %c0_16 = arith.constant 0 : index
      %21 = vector.load %arg27[%c0_14, %c0_15, %c0_16] : memref<1x1x1xf32, #tpu.memory_space<vmem>>, vector<1x1x1xf32>
      %22 = vector.shape_cast %21 : vector<1x1x1xf32> to vector<1x1xf32>
      %cst_17 = arith.constant dense<0xFF800000> : vector<1xf32>
      %23 = vector.multi_reduction <maximumf>, %9, %cst_17 [1] : vector<1x128xf32> to vector<1xf32>
      %24 = vector.shape_cast %23 : vector<1xf32> to vector<1x1xf32>
      %25 = arith.maximumf %22, %24 : vector<1x1xf32>
      %c0_18 = arith.constant 0 : index
      %c0_19 = arith.constant 0 : index
      %c0_20 = arith.constant 0 : index
      %26 = vector.load %arg28[%c0_18, %c0_19, %c0_20] : memref<1x1x1xf32, #tpu.memory_space<vmem>>, vector<1x1x1xf32>
      %27 = vector.shape_cast %26 : vector<1x1x1xf32> to vector<1x1xf32>
      %28 = arith.subf %22, %25 : vector<1x1xf32>
      %29 = math.exp %28 : vector<1x1xf32>
      %30 = arith.mulf %27, %29 : vector<1x1xf32>
      %31 = vector.broadcast %25 : vector<1x1xf32> to vector<1x128xf32>
      %32 = arith.subf %9, %31 : vector<1x128xf32>
      %33 = math.exp %32 : vector<1x128xf32>
      %cst_21 = arith.constant dense<0.000000e+00> : vector<1xf32>
      %34 = vector.multi_reduction <add>, %33, %cst_21 [1] : vector<1x128xf32> to vector<1xf32>
      %35 = vector.shape_cast %34 : vector<1xf32> to vector<1x1xf32>
      %36 = arith.addf %30, %35 : vector<1x1xf32>
      %c0_22 = arith.constant 0 : index
      %c0_23 = arith.constant 0 : index
      %c0_24 = arith.constant 0 : index
      %37 = vector.load %arg28[%c0_22, %c0_23, %c0_24] : memref<1x1x1xf32, #tpu.memory_space<vmem>>, vector<1x1x1xf32>
      %38 = vector.shape_cast %37 : vector<1x1x1xf32> to vector<1x1xf32>
      %39 = vector.shape_cast %36 : vector<1x1xf32> to vector<1x1x1xf32>
      tpu.vector_store %arg28[%c0_22, %c0_23, %c0_24], %39 {strides = array<i32>} : memref<1x1x1xf32, #tpu.memory_space<vmem>>, vector<1x1x1xf32>,
      %c0_25 = arith.constant 0 : index
      %c0_26 = arith.constant 0 : index
      %c0_27 = arith.constant 0 : index
      %40 = vector.load %arg27[%c0_25, %c0_26, %c0_27] : memref<1x1x1xf32, #tpu.memory_space<vmem>>, vector<1x1x1xf32>
      %41 = vector.shape_cast %40 : vector<1x1x1xf32> to vector<1x1xf32>
      %42 = vector.shape_cast %25 : vector<1x1xf32> to vector<1x1x1xf32>
      tpu.vector_store %arg27[%c0_25, %c0_26, %c0_27], %42 {strides = array<i32>} : memref<1x1x1xf32, #tpu.memory_space<vmem>>, vector<1x1x1xf32>,
    } else {
    }
    %c0_i32_12 = arith.constant 0 : i32
    %18 = arith.cmpi sge, %14, %c0_i32_12 : i32
    %19 = arith.extui %18 : i1 to i32
    %c0_i32_13 = arith.constant 0 : i32
    %20 = arith.cmpi ne, %19, %c0_i32_13 : i32
    scf.if %20 {
      %c128_i32 = arith.constant 128 : i32
      %21 = arith.muli %14, %c128_i32 : i32
      %22 = tpu.iota {dimensions = array<i32: 1>} : vector<1x128xi32>
      %23 = vector.broadcast %21 : i32 to vector<1x128xi32>
      %24 = arith.addi %23, %22 : vector<1x128xi32>
      %c16_i32 = arith.constant 16 : i32
      %25 = vector.broadcast %c16_i32 : i32 to vector<1x128xi32>
      %26 = arith.cmpi slt, %24, %25 : vector<1x128xi32>
      %cst_14 = arith.constant -1.000000e+30 : f32
      %27 = vector.broadcast %cst_14 : f32 to vector<1x128xf32>
      %28 = arith.select %26, %9, %27 : vector<1x128xi1>, vector<1x128xf32>
      %c0_15 = arith.constant 0 : index
      %c0_16 = arith.constant 0 : index
      %c0_17 = arith.constant 0 : index
      %29 = vector.load %arg27[%c0_15, %c0_16, %c0_17] : memref<1x1x1xf32, #tpu.memory_space<vmem>>, vector<1x1x1xf32>
      %30 = vector.shape_cast %29 : vector<1x1x1xf32> to vector<1x1xf32>
      %cst_18 = arith.constant dense<0xFF800000> : vector<1xf32>
      %31 = vector.multi_reduction <maximumf>, %28, %cst_18 [1] : vector<1x128xf32> to vector<1xf32>
      %32 = vector.shape_cast %31 : vector<1xf32> to vector<1x1xf32>
      %33 = arith.maximumf %30, %32 : vector<1x1xf32>
      %c0_19 = arith.constant 0 : index
      %c0_20 = arith.constant 0 : index
      %c0_21 = arith.constant 0 : index
      %34 = vector.load %arg28[%c0_19, %c0_20, %c0_21] : memref<1x1x1xf32, #tpu.memory_space<vmem>>, vector<1x1x1xf32>
      %35 = vector.shape_cast %34 : vector<1x1x1xf32> to vector<1x1xf32>
      %36 = arith.subf %30, %33 : vector<1x1xf32>
      %37 = math.exp %36 : vector<1x1xf32>
      %38 = arith.mulf %35, %37 : vector<1x1xf32>
      %39 = vector.broadcast %33 : vector<1x1xf32> to vector<1x128xf32>
      %40 = arith.subf %28, %39 : vector<1x128xf32>
      %41 = math.exp %40 : vector<1x128xf32>
      %cst_22 = arith.constant dense<0.000000e+00> : vector<1xf32>
      %42 = vector.multi_reduction <add>, %41, %cst_22 [1] : vector<1x128xf32> to vector<1xf32>
      %43 = vector.shape_cast %42 : vector<1xf32> to vector<1x1xf32>
      %44 = arith.addf %38, %43 : vector<1x1xf32>
      %c0_23 = arith.constant 0 : index
      %c0_24 = arith.constant 0 : index
      %c0_25 = arith.constant 0 : index
      %45 = vector.load %arg28[%c0_23, %c0_24, %c0_25] : memref<1x1x1xf32, #tpu.memory_space<vmem>>, vector<1x1x1xf32>
      %46 = vector.shape_cast %45 : vector<1x1x1xf32> to vector<1x1xf32>
      %47 = vector.shape_cast %44 : vector<1x1xf32> to vector<1x1x1xf32>
      tpu.vector_store %arg28[%c0_23, %c0_24, %c0_25], %47 {strides = array<i32>} : memref<1x1x1xf32, #tpu.memory_space<vmem>>, vector<1x1x1xf32>,
      %c0_26 = arith.constant 0 : index
      %c0_27 = arith.constant 0 : index
      %c0_28 = arith.constant 0 : index
      %48 = vector.load %arg27[%c0_26, %c0_27, %c0_28] : memref<1x1x1xf32, #tpu.memory_space<vmem>>, vector<1x1x1xf32>
      %49 = vector.shape_cast %48 : vector<1x1x1xf32> to vector<1x1xf32>
      %50 = vector.shape_cast %33 : vector<1x1xf32> to vector<1x1x1xf32>
      tpu.vector_store %arg27[%c0_26, %c0_27, %c0_28], %50 {strides = array<i32>} : memref<1x1x1xf32, #tpu.memory_space<vmem>>, vector<1x1x1xf32>,
    } else {
    }
    return
  }
  func.func @transform_0(%arg0: i32, %arg1: i32, %arg2: memref<1xi32, #tpu.memory_space<smem>>) -> (i32, i32, i32) {
    %c0 = arith.constant 0 : index
    %0 = memref.load %arg2[%c0] : memref<1xi32, #tpu.memory_space<smem>>
    %c0_i32 = arith.constant 0 : i32
    %c0_i32_0 = arith.constant 0 : i32
    %c0_i32_1 = arith.constant 0 : i32
    return %0, %c0_i32, %c0_i32_0 : i32, i32, i32
  }
  func.func @transform_1(%arg0: i32, %arg1: i32, %arg2: memref<1xi32, #tpu.memory_space<smem>>) -> (i32, i32) {
    %c0_i32 = arith.constant 0 : i32
    %c0_i32_0 = arith.constant 0 : i32
    %c0_i32_1 = arith.constant 0 : i32
    return %c0_i32, %c0_i32_0 : i32, i32
  }
  func.func @transform_2(%arg0: i32, %arg1: i32, %arg2: memref<1xi32, #tpu.memory_space<smem>>) -> (i32, i32) {
    %c0_i32 = arith.constant 0 : i32
    %c0_i32_0 = arith.constant 0 : i32
    %c0_i32_1 = arith.constant 0 : i32
    return %c0_i32, %c0_i32_0 : i32, i32
  }
  func.func @transform_3(%arg0: i32, %arg1: i32, %arg2: memref<1xi32, #tpu.memory_space<smem>>) -> (i32, i32) {
    %c0_i32 = arith.constant 0 : i32
    %c0_i32_0 = arith.constant 0 : i32
    %c0_i32_1 = arith.constant 0 : i32
    return %c0_i32, %c0_i32_0 : i32, i32
  }
  func.func @transform_4(%arg0: i32, %arg1: i32, %arg2: memref<1xi32, #tpu.memory_space<smem>>) -> (i32, i32) {
    %c0_i32 = arith.constant 0 : i32
    %c0_i32_0 = arith.constant 0 : i32
    %c0_i32_1 = arith.constant 0 : i32
    return %c0_i32, %c0_i32_0 : i32, i32
  }
  func.func @transform_5(%arg0: i32, %arg1: i32, %arg2: memref<1xi32, #tpu.memory_space<smem>>) -> (i32, i32) {
    %c0_i32 = arith.constant 0 : i32
    %c0_i32_0 = arith.constant 0 : i32
    %c0_i32_1 = arith.constant 0 : i32
    return %c0_i32, %c0_i32_0 : i32, i32
  }
  func.func @transform_6(%arg0: i32, %arg1: i32, %arg2: memref<1xi32, #tpu.memory_space<smem>>) -> (i32, i32) {
    %c0_i32 = arith.constant 0 : i32
    %c0_i32_0 = arith.constant 0 : i32
    %c0_i32_1 = arith.constant 0 : i32
    return %c0_i32, %c0_i32_0 : i32, i32
  }
  func.func @transform_7(%arg0: i32, %arg1: i32, %arg2: memref<1xi32, #tpu.memory_space<smem>>) -> (i32, i32) {
    %c0_i32 = arith.constant 0 : i32
    %c0_i32_0 = arith.constant 0 : i32
    %c0_i32_1 = arith.constant 0 : i32
    return %c0_i32, %c0_i32_0 : i32, i32
  }
  func.func @transform_8(%arg0: i32, %arg1: i32, %arg2: memref<1xi32, #tpu.memory_space<smem>>) -> (i32, i32) {
    %c0_i32 = arith.constant 0 : i32
    %c0_i32_0 = arith.constant 0 : i32
    %c0_i32_1 = arith.constant 0 : i32
    return %c0_i32, %c0_i32_0 : i32, i32
  }
  func.func @transform_9(%arg0: i32, %arg1: i32, %arg2: memref<1xi32, #tpu.memory_space<smem>>) -> (i32, i32) {
    %c0_i32 = arith.constant 0 : i32
    %c0_i32_0 = arith.constant 0 : i32
    %c0_i32_1 = arith.constant 0 : i32
    return %c0_i32, %c0_i32_0 : i32, i32
  }
  func.func @transform_10(%arg0: i32, %arg1: i32, %arg2: memref<1xi32, #tpu.memory_space<smem>>) -> (i32, i32) {
    %c0_i32 = arith.constant 0 : i32
    %c0_i32_0 = arith.constant 0 : i32
    %c0_i32_1 = arith.constant 0 : i32
    return %c0_i32, %c0_i32_0 : i32, i32
  }
  func.func @transform_11(%arg0: i32, %arg1: i32, %arg2: memref<1xi32, #tpu.memory_space<smem>>) -> (i32, i32) {
    %c0_i32 = arith.constant 0 : i32
    %c0_i32_0 = arith.constant 0 : i32
    %c0_i32_1 = arith.constant 0 : i32
    return %c0_i32, %c0_i32_0 : i32, i32
  }
  func.func @transform_12(%arg0: i32, %arg1: i32, %arg2: memref<1xi32, #tpu.memory_space<smem>>) -> (i32, i32) {
    %c0_i32 = arith.constant 0 : i32
    %c0_i32_0 = arith.constant 0 : i32
    %c0_i32_1 = arith.constant 0 : i32
    return %c0_i32, %c0_i32_0 : i32, i32
  }
  func.func @transform_13(%arg0: i32, %arg1: i32, %arg2: memref<1xi32, #tpu.memory_space<smem>>) -> (i32, i32) {
    %c0_i32 = arith.constant 0 : i32
    %c0_i32_0 = arith.constant 0 : i32
    %c0_i32_1 = arith.constant 0 : i32
    return %c0_i32, %c0_i32_0 : i32, i32
  }
  func.func @transform_14(%arg0: i32, %arg1: i32, %arg2: memref<1xi32, #tpu.memory_space<smem>>) -> (i32, i32) {
    %c0_i32 = arith.constant 0 : i32
    %c0_i32_0 = arith.constant 0 : i32
    %c0_i32_1 = arith.constant 0 : i32
    return %c0_i32, %c0_i32_0 : i32, i32
  }
  func.func @transform_15(%arg0: i32, %arg1: i32, %arg2: memref<1xi32, #tpu.memory_space<smem>>) -> (i32, i32) {
    %c0_i32 = arith.constant 0 : i32
    %c0_i32_0 = arith.constant 0 : i32
    %c0_i32_1 = arith.constant 0 : i32
    return %c0_i32, %c0_i32_0 : i32, i32
  }
  func.func @transform_16(%arg0: i32, %arg1: i32, %arg2: memref<1xi32, #tpu.memory_space<smem>>) -> (i32, i32) {
    %c0_i32 = arith.constant 0 : i32
    %c0_i32_0 = arith.constant 0 : i32
    %c0_i32_1 = arith.constant 0 : i32
    return %c0_i32, %c0_i32_0 : i32, i32
  }
  func.func @transform_17(%arg0: i32, %arg1: i32, %arg2: memref<1xi32, #tpu.memory_space<smem>>) -> (i32, i32) {
    %c0_i32 = arith.constant 0 : i32
    %c0_i32_0 = arith.constant 0 : i32
    %c0_i32_1 = arith.constant 0 : i32
    return %c0_i32, %c0_i32_0 : i32, i32
  }
  func.func @transform_18(%arg0: i32, %arg1: i32, %arg2: memref<1xi32, #tpu.memory_space<smem>>) -> (i32, i32) {
    %c0_i32 = arith.constant 0 : i32
    %c0_i32_0 = arith.constant 0 : i32
    %c0_i32_1 = arith.constant 0 : i32
    return %c0_i32, %c0_i32_0 : i32, i32
  }
  func.func @transform_19(%arg0: i32, %arg1: i32, %arg2: memref<1xi32, #tpu.memory_space<smem>>) -> (i32, i32) {
    %c1_i32 = arith.constant 1 : i32
    %0 = arith.muli %arg0, %c1_i32 : i32
    %1 = arith.addi %0, %arg1 : i32
    %c0_i32 = arith.constant 0 : i32
    %c0_i32_0 = arith.constant 0 : i32
    return %c0_i32, %1 : i32, i32
  }
  func.func @transform_20(%arg0: i32, %arg1: i32, %arg2: memref<1xi32, #tpu.memory_space<smem>>) -> (i32, i32) {
    %c1_i32 = arith.constant 1 : i32
    %0 = arith.muli %arg0, %c1_i32 : i32
    %1 = arith.addi %0, %arg1 : i32
    %c0_i32 = arith.constant 0 : i32
    %c0_i32_0 = arith.constant 0 : i32
    return %c0_i32, %1 : i32, i32
  }
  func.func @transform_21(%arg0: i32, %arg1: i32, %arg2: memref<1xi32, #tpu.memory_space<smem>>) -> (i32, i32, i32) {
    %c1_i32 = arith.constant 1 : i32
    %0 = arith.muli %arg0, %c1_i32 : i32
    %1 = arith.addi %0, %arg1 : i32
    %c0_i32 = arith.constant 0 : i32
    %c0_i32_0 = arith.constant 0 : i32
    %c0_i32_1 = arith.constant 0 : i32
    return %1, %c0_i32, %c0_i32_0 : i32, i32, i32
  }
  func.func @transform_22(%arg0: i32, %arg1: i32, %arg2: memref<1xi32, #tpu.memory_space<smem>>) -> (i32, i32, i32) {
    %c0_i32 = arith.constant 0 : i32
    %c0_i32_0 = arith.constant 0 : i32
    %c0_i32_1 = arith.constant 0 : i32
    return %arg0, %c0_i32, %c0_i32_0 : i32, i32, i32
  }
  func.func @transform_23(%arg0: i32, %arg1: i32, %arg2: memref<1xi32, #tpu.memory_space<smem>>) -> (i32, i32, i32) {
    %c0_i32 = arith.constant 0 : i32
    %c0_i32_0 = arith.constant 0 : i32
    %c0_i32_1 = arith.constant 0 : i32
    return %arg0, %c0_i32, %c0_i32_0 : i32, i32, i32
  }
  func.func @transform_24(%arg0: i32, %arg1: i32, %arg2: memref<1xi32, #tpu.memory_space<smem>>) -> (i32, i32, i32) {
    %c0_i32 = arith.constant 0 : i32
    %c0_i32_0 = arith.constant 0 : i32
    %c0_i32_1 = arith.constant 0 : i32
    return %arg0, %c0_i32, %c0_i32_0 : i32, i32, i32
  }
  func.func @transform_25(%arg0: i32, %arg1: i32, %arg2: memref<1xi32, #tpu.memory_space<smem>>) -> (i32, i32, i32) {
    %c0_i32 = arith.constant 0 : i32
    %c0_i32_0 = arith.constant 0 : i32
    %c0_i32_1 = arith.constant 0 : i32
    return %arg0, %c0_i32, %c0_i32_0 : i32, i32, i32
  }
}

</mosaic_0001>

<llo_original>
// kernel: tpu_custom_call.1
$region0: #{tpu_custom_call.1}
  #allocation0 [shape = 'u32[]', space=smem, size = 0x4, offset = 0x4, fixed_abs, tag = 'smem constant byte address 0x4 - core index']
  #allocation1 [shape = 'u32[144,128]{1,0:T(1,128)}', space=vmem, size = 0x12000, scoped, tag = 'internal scratch']
  #allocation2 [shape = 's32[1]{0}', space=sflag, size = 0x4, scoped, tag = 'scoped memory for tpu_custom_call.1']
  #allocation3 [shape = 's32[1]{0:T(128)S(6)}', space=smem, size = 0x200, scoped, tag = 'prefetched SMEM operand 0']
  %s0 = inlined_call_operand.<no memory space> [shape: s32[1], index: 0, kind: input, shape index: {}]
  %s1 = inlined_call_operand.vmem [shape: bf16[16,1,32], index: 1, kind: input, shape index: {}]
  %s2 = inlined_call_operand.hbm [shape: f32[1,32], index: 2, kind: input, shape index: {}]
  %s3 = inlined_call_operand.vmem [shape: f32[10,32], index: 3, kind: input, shape index: {}]
  %s4 = inlined_call_operand.vmem [shape: bf16[32,10], index: 4, kind: input, shape index: {}]
  %s5 = inlined_call_operand.vmem [shape: bf16[32,10], index: 5, kind: input, shape index: {}]
  %s6 = inlined_call_operand.hbm [shape: f32[1,10], index: 6, kind: input, shape index: {}]
  %s7 = inlined_call_operand.vmem [shape: bf16[32,32], index: 7, kind: input, shape index: {}]
  %s8 = inlined_call_operand.vmem [shape: bf16[32,32], index: 8, kind: input, shape index: {}]
  %s9 = inlined_call_operand.hbm [shape: f32[1,32], index: 9, kind: input, shape index: {}]
  %s10 = inlined_call_operand.vmem [shape: bf16[32,32], index: 10, kind: input, shape index: {}]
  %s11 = inlined_call_operand.vmem [shape: bf16[32,32], index: 11, kind: input, shape index: {}]
  %s12 = inlined_call_operand.hbm [shape: bf16[32,32], index: 12, kind: input, shape index: {}]
  %s13 = inlined_call_operand.hbm [shape: bf16[32,32], index: 13, kind: input, shape index: {}]
  %s14 = inlined_call_operand.hbm [shape: bf16[32,32], index: 14, kind: input, shape index: {}]
  %s15 = inlined_call_operand.vmem [shape: bf16[32,32], index: 15, kind: input, shape index: {}]
  %s16 = inlined_call_operand.vmem [shape: f32[1,32], index: 16, kind: input, shape index: {}]
  %s17 = inlined_call_operand.vmem [shape: f32[1,32], index: 17, kind: input, shape index: {}]
  %s18 = inlined_call_operand.vmem [shape: f32[1,32], index: 18, kind: input, shape index: {}]
  %s19 = inlined_call_operand.vmem [shape: f32[1,32], index: 19, kind: input, shape index: {}]
  %s20 = inlined_call_operand.vmem [shape: bf16[32,256], index: 20, kind: input, shape index: {}]
  %s21 = inlined_call_operand.vmem [shape: f32[1,256], index: 21, kind: input, shape index: {}]
  %s22 = inlined_call_operand.hbm [shape: f32[2,1,128], index: 22, kind: output, shape index: {0}]
  %s23 = inlined_call_operand.hbm [shape: f32[2,1,32], index: 23, kind: output, shape index: {1}]
  %s24 = inlined_call_operand.hbm [shape: f32[2,1,10], index: 24, kind: output, shape index: {2}]
  %s25 = inlined_call_operand.vmem [shape: f32[2,1,1], index: 25, kind: output, shape index: {3}]
  %s26 = inlined_call_operand.vmem [shape: f32[2,1,1], index: 26, kind: output, shape index: {4}]
  %27 = xla_tuple %s22, %s23, %s24, %s25, %s26
  %s28 = sld [smem:[#allocation0]]
  $region226: #{tpu_custom_call.1} parent=0
    _
  %s30 = ssub.s32 1, %s28
  %s31 = scalar_select 0, %s30, %s28
  %32 = sst [smem:[#allocation3]] %s0
  $region1: #{tpu_custom_call.1} parent=0
    #allocation4 [shape = 'u8[512]{0}', space=vmem, size = 0x400, scoped, tag = 'input window, operand 2, single buffered']
    #allocation5 [shape = 's32[2]{0}', space=sflag, size = 0x8, scoped, tag = 'scoped memory for tpu_custom_call.1']
    #allocation6 [shape = 's32[2]{0}', space=sflag, size = 0x8, scoped, tag = 'scoped memory for tpu_custom_call.1']
    #allocation7 [shape = 'u8[512]{0}', space=vmem, size = 0x400, scoped, tag = 'input window, operand 6, single buffered']
    #allocation8 [shape = 's32[1]{0}', space=sflag, size = 0x4, scoped, tag = 'scoped memory for tpu_custom_call.1']
    #allocation9 [shape = 'u8[512]{0}', space=vmem, size = 0x400, scoped, tag = 'input window, operand 9, single buffered']
    #allocation10 [shape = 'u8[8192]{0}', space=vmem, size = 0x2000, scoped, tag = 'input window, operand 12, single buffered']
    #allocation11 [shape = 's32[1]{0}', space=sflag, size = 0x4, scoped, tag = 'scoped memory for tpu_custom_call.1']
    #allocation12 [shape = 'u8[8192]{0}', space=vmem, size = 0x2000, scoped, tag = 'input window, operand 13, single buffered']
    #allocation13 [shape = 'u8[8192]{0}', space=vmem, size = 0x2000, scoped, tag = 'input window, operand 14, single buffered']
    #allocation14 [shape = 's32[1]{0}', space=sflag, size = 0x4, scoped, tag = 'scoped memory for tpu_custom_call.1']
    #allocation15 [shape = 'u8[16384]{0}', space=vmem, size = 0x4000, scoped, tag = 'input window, operand 20']
    #allocation16 [shape = 'u8[1024]{0}', space=vmem, size = 0x400, scoped, tag = 'output window, operand 0']
    #allocation17 [shape = 'u8[1024]{0}', space=vmem, size = 0x400, scoped, tag = 'output window, operand 1']
    #allocation18 [shape = 's32[2]{0}', space=sflag, size = 0x8, scoped, tag = 'scoped memory for tpu_custom_call.1']
    #allocation19 [shape = 'u8[1024]{0}', space=vmem, size = 0x400, scoped, tag = 'output window, operand 2']
    %33 = vsyncpa [#allocation5], 0
    %34 = vsyncpa [#allocation8], 0
    %35 = vsyncpa [#allocation11], 0
    %36 = vsyncpa [#allocation14], 0
    %37 = vsyncpa [#allocation6], 0
    %s38 = scalar_lea.sflag [#allocation6], 1
    %39 = vsyncpa %s38, 0
    %40 = vsyncpa [#allocation18], 0
    %s41 = scalar_lea.sflag [#allocation18], 1
    %42 = vsyncpa %s41, 0
    loop: start=0, step=1, limit=4
    $region2: #{tpu_custom_call.1} parent=1 // loop_pre_header
      _
    $region3: #{tpu_custom_call.1} parent=1 // loop_header
      %s44 = sphi 0, %s48
      %p45 = scmp.ge.s32.totalorder %s44, 4
      %s51 = sphi 0, %s63
      %s52 = sphi 0, %s59
      %s53 = sphi 0, %s51
      %s54 = sphi 0, %s52
      %s55 = sphi 0, %s53
      %s56 = sphi 0, %s54
      %s68 = sphi 0, %s70
      %s71 = sphi 0, %s68
      %s72 = sphi 0, %s71
      %s88 = sphi 0, %s72
      %s92 = sphi 0, %s92
      %s94 = sphi 0, %s92
      %s95 = sphi 0, %s94
      %s109 = sphi 0, %s95
      %s113 = sphi 0, %s113
      %s115 = sphi 0, %s113
      %s116 = sphi 0, %s115
      %s130 = sphi 0, %s116
      %s134 = sphi 0, %s134
      %s136 = sphi 0, %s134
      %s137 = sphi 0, %s136
      %s151 = sphi 0, %s137
      %s155 = sphi 0, %s155
      %s157 = sphi 0, %s155
      %s158 = sphi 0, %s157
      %s172 = sphi 0, %s158
      %s176 = sphi 0, %s176
      %s178 = sphi 0, %s176
      %s179 = sphi 0, %s178
      %s193 = sphi 0, %s179
      %s197 = sphi 0, %s197
      %s199 = sphi 0, %s197
      %s200 = sphi 0, %s199
      %s214 = sphi 0, %s200
      %s218 = sphi 0, %s218
      %s220 = sphi 0, %s218
      %s221 = sphi 0, %s220
      %s235 = sphi 0, %s221
      %s239 = sphi 0, %s239
      %s241 = sphi 0, %s239
      %s242 = sphi 0, %s241
      %s256 = sphi 0, %s242
      %s260 = sphi 0, %s260
      %s262 = sphi 0, %s260
      %s263 = sphi 0, %s262
      %s277 = sphi 0, %s263
      %s281 = sphi 0, %s281
      %s283 = sphi 0, %s281
      %s284 = sphi 0, %s283
      %s298 = sphi 0, %s284
      %s302 = sphi 0, %s302
      %s304 = sphi 0, %s302
      %s305 = sphi 0, %s304
      %s319 = sphi 0, %s305
      %s323 = sphi 0, %s323
      %s325 = sphi 0, %s323
      %s326 = sphi 0, %s325
      %s340 = sphi 0, %s326
      %s344 = sphi 0, %s344
      %s346 = sphi 0, %s344
      %s347 = sphi 0, %s346
      %s361 = sphi 0, %s347
      %s365 = sphi 0, %s365
      %s367 = sphi 0, %s365
      %s368 = sphi 0, %s367
      %s382 = sphi 0, %s368
      %s386 = sphi 0, %s386
      %s388 = sphi 0, %s386
      %s389 = sphi 0, %s388
      %s403 = sphi 0, %s389
      %s407 = sphi 0, %s407
      %s409 = sphi 0, %s407
      %s410 = sphi 0, %s409
      %s424 = sphi 0, %s410
      %s428 = sphi 0, %s428
      %s430 = sphi 0, %s428
      %s431 = sphi 0, %s430
      %s445 = sphi 0, %s431
      %s449 = sphi 0, %s449
      %s451 = sphi 0, %s449
      %s452 = sphi 0, %s451
      %s466 = sphi 0, %s452
      %s474 = sphi 0, %s476
      %s477 = sphi 0, %s474
      %s478 = sphi 0, %s477
      %s494 = sphi 0, %s478
      %s502 = sphi 0, %s504
      %s505 = sphi 0, %s502
      %s506 = sphi 0, %s505
      %s522 = sphi 0, %s506
      %s530 = sphi 0, %s532
      %s533 = sphi 0, %s530
      %s534 = sphi 0, %s533
      %s550 = sphi 0, %s534
      %s556 = sphi 0, %s558
      %s559 = sphi 0, %s556
      %s560 = sphi 0, %s559
      %s576 = sphi 0, %s560
      %s582 = sphi 0, %s584
      %s585 = sphi 0, %s582
      %s586 = sphi 0, %s585
      %s602 = sphi 0, %s586
      %s608 = sphi 0, %s610
      %s611 = sphi 0, %s608
      %s612 = sphi 0, %s611
      %s628 = sphi 0, %s612
      %s634 = sphi 0, %s636
      %s637 = sphi 0, %s634
      %s638 = sphi 0, %s637
      %s654 = sphi 0, %s638
    $region4: #{tpu_custom_call.1} parent=1 // loop_header_branch
      %47 = sbr.rel (%p45) target = $region8
    $region5: #{tpu_custom_call.1} parent=1 // loop_body
      %s49 = ssub.s32 %s44, 1
      %s50 = ssub.s32 %s44, 2
      %s57 = sadd.s32 1, %s52
      %p58 = scmp.ge.s32.totalorder %s57, 1
      %s59 = scalar_select %p58, 0, %s57
      %s60 = sadd.s32 1, %s51
      %s61 = scalar_select %p58, %s60, %s51
      %p62 = scmp.ge.s32.totalorder %s61, 2
      %s63 = scalar_select %p62, 0, %s61
      %s64 = sld [smem:[#allocation3]]
      %s65 = sld [smem:[#allocation3]]
      %s66 = ssub.s32 %s64, %s65
      %p67 = scmp.eq.s32.totalorder %s66, 0
      %s69 = sadd.s32 %s68, 1
      %s70 = scalar_select %p67, %s68, %s69
      %p73 = pneg %p67
      %p74 = scmp.eq.s32.totalorder %s44, 1
      %p75 = por %p73, %p74
      %p76 = scmp.ne.s32.totalorder %s68, %s71
      %p77 = scmp.eq.s32.totalorder %s44, 0
      %p78 = por %p76, %p77
      %p79 = scmp.ne.s32.totalorder %s68, %s71
      %p80 = scmp.eq.s32.totalorder %s49, 1
      %p81 = por %p79, %p80
      %p82 = scmp.ne.s32.totalorder %s71, %s72
      %p83 = scmp.eq.s32.totalorder %s49, 0
      %p84 = por %p82, %p83
      %p85 = scmp.ne.s32.totalorder %s71, %s72
      %p86 = scmp.eq.s32.totalorder %s50, 1
      %p87 = por %p85, %p86
      %p89 = scmp.ne.s32.totalorder %s72, %s88
      %p90 = scmp.eq.s32.totalorder %s50, 0
      %p91 = por %p89, %p90
      %s93 = sadd.s32 %s92, 1
      %p96 = scmp.eq.s32.totalorder %s44, 1
      %p97 = scmp.ne.s32.totalorder %s92, %s94
      %p98 = scmp.eq.s32.totalorder %s44, 0
      %p99 = por %p97, %p98
      %p100 = scmp.ne.s32.totalorder %s92, %s94
      %p101 = scmp.eq.s32.totalorder %s49, 1
      %p102 = por %p100, %p101
      %p103 = scmp.ne.s32.totalorder %s94, %s95
      %p104 = scmp.eq.s32.totalorder %s49, 0
      %p105 = por %p103, %p104
      %p106 = scmp.ne.s32.totalorder %s94, %s95
      %p107 = scmp.eq.s32.totalorder %s50, 1
      %p108 = por %p106, %p107
      %p110 = scmp.ne.s32.totalorder %s95, %s109
      %p111 = scmp.eq.s32.totalorder %s50, 0
      %p112 = por %p110, %p111
      %s114 = sadd.s32 %s113, 1
      %p117 = scmp.eq.s32.totalorder %s44, 1
      %p118 = scmp.ne.s32.totalorder %s113, %s115
      %p119 = scmp.eq.s32.totalorder %s44, 0
      %p120 = por %p118, %p119
      %p121 = scmp.ne.s32.totalorder %s113, %s115
      %p122 = scmp.eq.s32.totalorder %s49, 1
      %p123 = por %p121, %p122
      %p124 = scmp.ne.s32.totalorder %s115, %s116
      %p125 = scmp.eq.s32.totalorder %s49, 0
      %p126 = por %p124, %p125
      %p127 = scmp.ne.s32.totalorder %s115, %s116
      %p128 = scmp.eq.s32.totalorder %s50, 1
      %p129 = por %p127, %p128
      %p131 = scmp.ne.s32.totalorder %s116, %s130
      %p132 = scmp.eq.s32.totalorder %s50, 0
      %p133 = por %p131, %p132
      %s135 = sadd.s32 %s134, 1
      %p138 = scmp.eq.s32.totalorder %s44, 1
      %p139 = scmp.ne.s32.totalorder %s134, %s136
      %p140 = scmp.eq.s32.totalorder %s44, 0
      %p141 = por %p139, %p140
      %p142 = scmp.ne.s32.totalorder %s134, %s136
      %p143 = scmp.eq.s32.totalorder %s49, 1
      %p144 = por %p142, %p143
      %p145 = scmp.ne.s32.totalorder %s136, %s137
      %p146 = scmp.eq.s32.totalorder %s49, 0
      %p147 = por %p145, %p146
      %p148 = scmp.ne.s32.totalorder %s136, %s137
      %p149 = scmp.eq.s32.totalorder %s50, 1
      %p150 = por %p148, %p149
      %p152 = scmp.ne.s32.totalorder %s137, %s151
      %p153 = scmp.eq.s32.totalorder %s50, 0
      %p154 = por %p152, %p153
      %s156 = sadd.s32 %s155, 1
      %p159 = scmp.eq.s32.totalorder %s44, 1
      %p160 = scmp.ne.s32.totalorder %s155, %s157
      %p161 = scmp.eq.s32.totalorder %s44, 0
      %p162 = por %p160, %p161
      %p163 = scmp.ne.s32.totalorder %s155, %s157
      %p164 = scmp.eq.s32.totalorder %s49, 1
      %p165 = por %p163, %p164
      %p166 = scmp.ne.s32.totalorder %s157, %s158
      %p167 = scmp.eq.s32.totalorder %s49, 0
      %p168 = por %p166, %p167
      %p169 = scmp.ne.s32.totalorder %s157, %s158
      %p170 = scmp.eq.s32.totalorder %s50, 1
      %p171 = por %p169, %p170
      %p173 = scmp.ne.s32.totalorder %s158, %s172
      %p174 = scmp.eq.s32.totalorder %s50, 0
      %p175 = por %p173, %p174
      %s177 = sadd.s32 %s176, 1
      %p180 = scmp.eq.s32.totalorder %s44, 1
      %p181 = scmp.ne.s32.totalorder %s176, %s178
      %p182 = scmp.eq.s32.totalorder %s44, 0
      %p183 = por %p181, %p182
      %p184 = scmp.ne.s32.totalorder %s176, %s178
      %p185 = scmp.eq.s32.totalorder %s49, 1
      %p186 = por %p184, %p185
      %p187 = scmp.ne.s32.totalorder %s178, %s179
      %p188 = scmp.eq.s32.totalorder %s49, 0
      %p189 = por %p187, %p188
      %p190 = scmp.ne.s32.totalorder %s178, %s179
      %p191 = scmp.eq.s32.totalorder %s50, 1
      %p192 = por %p190, %p191
      %p194 = scmp.ne.s32.totalorder %s179, %s193
      %p195 = scmp.eq.s32.totalorder %s50, 0
      %p196 = por %p194, %p195
      %s198 = sadd.s32 %s197, 1
      %p201 = scmp.eq.s32.totalorder %s44, 1
      %p202 = scmp.ne.s32.totalorder %s197, %s199
      %p203 = scmp.eq.s32.totalorder %s44, 0
      %p204 = por %p202, %p203
      %p205 = scmp.ne.s32.totalorder %s197, %s199
      %p206 = scmp.eq.s32.totalorder %s49, 1
      %p207 = por %p205, %p206
      %p208 = scmp.ne.s32.totalorder %s199, %s200
      %p209 = scmp.eq.s32.totalorder %s49, 0
      %p210 = por %p208, %p209
      %p211 = scmp.ne.s32.totalorder %s199, %s200
      %p212 = scmp.eq.s32.totalorder %s50, 1
      %p213 = por %p211, %p212
      %p215 = scmp.ne.s32.totalorder %s200, %s214
      %p216 = scmp.eq.s32.totalorder %s50, 0
      %p217 = por %p215, %p216
      %s219 = sadd.s32 %s218, 1
      %p222 = scmp.eq.s32.totalorder %s44, 1
      %p223 = scmp.ne.s32.totalorder %s218, %s220
      %p224 = scmp.eq.s32.totalorder %s44, 0
      %p225 = por %p223, %p224
      %p226 = scmp.ne.s32.totalorder %s218, %s220
      %p227 = scmp.eq.s32.totalorder %s49, 1
      %p228 = por %p226, %p227
      %p229 = scmp.ne.s32.totalorder %s220, %s221
      %p230 = scmp.eq.s32.totalorder %s49, 0
      %p231 = por %p229, %p230
      %p232 = scmp.ne.s32.totalorder %s220, %s221
      %p233 = scmp.eq.s32.totalorder %s50, 1
      %p234 = por %p232, %p233
      %p236 = scmp.ne.s32.totalorder %s221, %s235
      %p237 = scmp.eq.s32.totalorder %s50, 0
      %p238 = por %p236, %p237
      %s240 = sadd.s32 %s239, 1
      %p243 = scmp.eq.s32.totalorder %s44, 1
      %p244 = scmp.ne.s32.totalorder %s239, %s241
      %p245 = scmp.eq.s32.totalorder %s44, 0
      %p246 = por %p244, %p245
      %p247 = scmp.ne.s32.totalorder %s239, %s241
      %p248 = scmp.eq.s32.totalorder %s49, 1
      %p249 = por %p247, %p248
      %p250 = scmp.ne.s32.totalorder %s241, %s242
      %p251 = scmp.eq.s32.totalorder %s49, 0
      %p252 = por %p250, %p251
      %p253 = scmp.ne.s32.totalorder %s241, %s242
      %p254 = scmp.eq.s32.totalorder %s50, 1
      %p255 = por %p253, %p254
      %p257 = scmp.ne.s32.totalorder %s242, %s256
      %p258 = scmp.eq.s32.totalorder %s50, 0
      %p259 = por %p257, %p258
      %s261 = sadd.s32 %s260, 1
      %p264 = scmp.eq.s32.totalorder %s44, 1
      %p265 = scmp.ne.s32.totalorder %s260, %s262
      %p266 = scmp.eq.s32.totalorder %s44, 0
      %p267 = por %p265, %p266
      %p268 = scmp.ne.s32.totalorder %s260, %s262
      %p269 = scmp.eq.s32.totalorder %s49, 1
      %p270 = por %p268, %p269
      %p271 = scmp.ne.s32.totalorder %s262, %s263
      %p272 = scmp.eq.s32.totalorder %s49, 0
      %p273 = por %p271, %p272
      %p274 = scmp.ne.s32.totalorder %s262, %s263
      %p275 = scmp.eq.s32.totalorder %s50, 1
      %p276 = por %p274, %p275
      %p278 = scmp.ne.s32.totalorder %s263, %s277
      %p279 = scmp.eq.s32.totalorder %s50, 0
      %p280 = por %p278, %p279
      %s282 = sadd.s32 %s281, 1
      %p285 = scmp.eq.s32.totalorder %s44, 1
      %p286 = scmp.ne.s32.totalorder %s281, %s283
      %p287 = scmp.eq.s32.totalorder %s44, 0
      %p288 = por %p286, %p287
      %p289 = scmp.ne.s32.totalorder %s281, %s283
      %p290 = scmp.eq.s32.totalorder %s49, 1
      %p291 = por %p289, %p290
      %p292 = scmp.ne.s32.totalorder %s283, %s284
      %p293 = scmp.eq.s32.totalorder %s49, 0
      %p294 = por %p292, %p293
      %p295 = scmp.ne.s32.totalorder %s283, %s284
      %p296 = scmp.eq.s32.totalorder %s50, 1
      %p297 = por %p295, %p296
      %p299 = scmp.ne.s32.totalorder %s284, %s298
      %p300 = scmp.eq.s32.totalorder %s50, 0
      %p301 = por %p299, %p300
      %s303 = sadd.s32 %s302, 1
      %p306 = scmp.eq.s32.totalorder %s44, 1
      %p307 = scmp.ne.s32.totalorder %s302, %s304
      %p308 = scmp.eq.s32.totalorder %s44, 0
      %p309 = por %p307, %p308
      %p310 = scmp.ne.s32.totalorder %s302, %s304
      %p311 = scmp.eq.s32.totalorder %s49, 1
      %p312 = por %p310, %p311
      %p313 = scmp.ne.s32.totalorder %s304, %s305
      %p314 = scmp.eq.s32.totalorder %s49, 0
      %p315 = por %p313, %p314
      %p316 = scmp.ne.s32.totalorder %s304, %s305
      %p317 = scmp.eq.s32.totalorder %s50, 1
      %p318 = por %p316, %p317
      %p320 = scmp.ne.s32.totalorder %s305, %s319
      %p321 = scmp.eq.s32.totalorder %s50, 0
      %p322 = por %p320, %p321
      %s324 = sadd.s32 %s323, 1
      %p327 = scmp.eq.s32.totalorder %s44, 1
      %p328 = scmp.ne.s32.totalorder %s323, %s325
      %p329 = scmp.eq.s32.totalorder %s44, 0
      %p330 = por %p328, %p329
      %p331 = scmp.ne.s32.totalorder %s323, %s325
      %p332 = scmp.eq.s32.totalorder %s49, 1
      %p333 = por %p331, %p332
      %p334 = scmp.ne.s32.totalorder %s325, %s326
      %p335 = scmp.eq.s32.totalorder %s49, 0
      %p336 = por %p334, %p335
      %p337 = scmp.ne.s32.totalorder %s325, %s326
      %p338 = scmp.eq.s32.totalorder %s50, 1
      %p339 = por %p337, %p338
      %p341 = scmp.ne.s32.totalorder %s326, %s340
      %p342 = scmp.eq.s32.totalorder %s50, 0
      %p343 = por %p341, %p342
      %s345 = sadd.s32 %s344, 1
      %p348 = scmp.eq.s32.totalorder %s44, 1
      %p349 = scmp.ne.s32.totalorder %s344, %s346
      %p350 = scmp.eq.s32.totalorder %s44, 0
      %p351 = por %p349, %p350
      %p352 = scmp.ne.s32.totalorder %s344, %s346
      %p353 = scmp.eq.s32.totalorder %s49, 1
      %p354 = por %p352, %p353
      %p355 = scmp.ne.s32.totalorder %s346, %s347
      %p356 = scmp.eq.s32.totalorder %s49, 0
      %p357 = por %p355, %p356
      %p358 = scmp.ne.s32.totalorder %s346, %s347
      %p359 = scmp.eq.s32.totalorder %s50, 1
      %p360 = por %p358, %p359
      %p362 = scmp.ne.s32.totalorder %s347, %s361
      %p363 = scmp.eq.s32.totalorder %s50, 0
      %p364 = por %p362, %p363
      %s366 = sadd.s32 %s365, 1
      %p369 = scmp.eq.s32.totalorder %s44, 1
      %p370 = scmp.ne.s32.totalorder %s365, %s367
      %p371 = scmp.eq.s32.totalorder %s44, 0
      %p372 = por %p370, %p371
      %p373 = scmp.ne.s32.totalorder %s365, %s367
      %p374 = scmp.eq.s32.totalorder %s49, 1
      %p375 = por %p373, %p374
      %p376 = scmp.ne.s32.totalorder %s367, %s368
      %p377 = scmp.eq.s32.totalorder %s49, 0
      %p378 = por %p376, %p377
      %p379 = scmp.ne.s32.totalorder %s367, %s368
      %p380 = scmp.eq.s32.totalorder %s50, 1
      %p381 = por %p379, %p380
      %p383 = scmp.ne.s32.totalorder %s368, %s382
      %p384 = scmp.eq.s32.totalorder %s50, 0
      %p385 = por %p383, %p384
      %s387 = sadd.s32 %s386, 1
      %p390 = scmp.eq.s32.totalorder %s44, 1
      %p391 = scmp.ne.s32.totalorder %s386, %s388
      %p392 = scmp.eq.s32.totalorder %s44, 0
      %p393 = por %p391, %p392
      %p394 = scmp.ne.s32.totalorder %s386, %s388
      %p395 = scmp.eq.s32.totalorder %s49, 1
      %p396 = por %p394, %p395
      %p397 = scmp.ne.s32.totalorder %s388, %s389
      %p398 = scmp.eq.s32.totalorder %s49, 0
      %p399 = por %p397, %p398
      %p400 = scmp.ne.s32.totalorder %s388, %s389
      %p401 = scmp.eq.s32.totalorder %s50, 1
      %p402 = por %p400, %p401
      %p404 = scmp.ne.s32.totalorder %s389, %s403
      %p405 = scmp.eq.s32.totalorder %s50, 0
      %p406 = por %p404, %p405
      %s408 = sadd.s32 %s407, 1
      %p411 = scmp.eq.s32.totalorder %s44, 1
      %p412 = scmp.ne.s32.totalorder %s407, %s409
      %p413 = scmp.eq.s32.totalorder %s44, 0
      %p414 = por %p412, %p413
      %p415 = scmp.ne.s32.totalorder %s407, %s409
      %p416 = scmp.eq.s32.totalorder %s49, 1
      %p417 = por %p415, %p416
      %p418 = scmp.ne.s32.totalorder %s409, %s410
      %p419 = scmp.eq.s32.totalorder %s49, 0
      %p420 = por %p418, %p419
      %p421 = scmp.ne.s32.totalorder %s409, %s410
      %p422 = scmp.eq.s32.totalorder %s50, 1
      %p423 = por %p421, %p422
      %p425 = scmp.ne.s32.totalorder %s410, %s424
      %p426 = scmp.eq.s32.totalorder %s50, 0
      %p427 = por %p425, %p426
      %s429 = sadd.s32 %s428, 1
      %p432 = scmp.eq.s32.totalorder %s44, 1
      %p433 = scmp.ne.s32.totalorder %s428, %s430
      %p434 = scmp.eq.s32.totalorder %s44, 0
      %p435 = por %p433, %p434
      %p436 = scmp.ne.s32.totalorder %s428, %s430
      %p437 = scmp.eq.s32.totalorder %s49, 1
      %p438 = por %p436, %p437
      %p439 = scmp.ne.s32.totalorder %s430, %s431
      %p440 = scmp.eq.s32.totalorder %s49, 0
      %p441 = por %p439, %p440
      %p442 = scmp.ne.s32.totalorder %s430, %s431
      %p443 = scmp.eq.s32.totalorder %s50, 1
      %p444 = por %p442, %p443
      %p446 = scmp.ne.s32.totalorder %s431, %s445
      %p447 = scmp.eq.s32.totalorder %s50, 0
      %p448 = por %p446, %p447
      %s450 = sadd.s32 %s449, 1
      %p453 = scmp.eq.s32.totalorder %s44, 1
      %p454 = scmp.ne.s32.totalorder %s449, %s451
      %p455 = scmp.eq.s32.totalorder %s44, 0
      %p456 = por %p454, %p455
      %p457 = scmp.ne.s32.totalorder %s449, %s451
      %p458 = scmp.eq.s32.totalorder %s49, 1
      %p459 = por %p457, %p458
      %p460 = scmp.ne.s32.totalorder %s451, %s452
      %p461 = scmp.eq.s32.totalorder %s49, 0
      %p462 = por %p460, %p461
      %p463 = scmp.ne.s32.totalorder %s451, %s452
      %p464 = scmp.eq.s32.totalorder %s50, 1
      %p465 = por %p463, %p464
      %p467 = scmp.ne.s32.totalorder %s452, %s466
      %p468 = scmp.eq.s32.totalorder %s50, 0
      %p469 = por %p467, %p468
      %s470 = sadd.s32 %s51, %s52
      %s471 = sadd.s32 %s63, %s59
      %s472 = ssub.s32 %s470, %s471
      %p473 = scmp.eq.s32.totalorder %s472, 0
      %s475 = sadd.s32 %s474, 1
      %s476 = scalar_select %p473, %s474, %s475
      %p479 = pneg %p473
      %p480 = scmp.eq.s32.totalorder %s44, 1
      %p481 = por %p479, %p480
      %p482 = scmp.ne.s32.totalorder %s474, %s477
      %p483 = scmp.eq.s32.totalorder %s44, 0
      %p484 = por %p482, %p483
      %p485 = scmp.ne.s32.totalorder %s474, %s477
      %p486 = scmp.eq.s32.totalorder %s49, 1
      %p487 = por %p485, %p486
      %p488 = scmp.ne.s32.totalorder %s477, %s478
      %p489 = scmp.eq.s32.totalorder %s49, 0
      %p490 = por %p488, %p489
      %p491 = scmp.ne.s32.totalorder %s477, %s478
      %p492 = scmp.eq.s32.totalorder %s50, 1
      %p493 = por %p491, %p492
      %p495 = scmp.ne.s32.totalorder %s478, %s494
      %p496 = scmp.eq.s32.totalorder %s50, 0
      %p497 = por %p495, %p496
      %s498 = sadd.s32 %s51, %s52
      %s499 = sadd.s32 %s63, %s59
      %s500 = ssub.s32 %s498, %s499
      %p501 = scmp.eq.s32.totalorder %s500, 0
      %s503 = sadd.s32 %s502, 1
      %s504 = scalar_select %p501, %s502, %s503
      %p507 = pneg %p501
      %p508 = scmp.eq.s32.totalorder %s44, 1
      %p509 = por %p507, %p508
      %p510 = scmp.ne.s32.totalorder %s502, %s505
      %p511 = scmp.eq.s32.totalorder %s44, 0
      %p512 = por %p510, %p511
      %p513 = scmp.ne.s32.totalorder %s502, %s505
      %p514 = scmp.eq.s32.totalorder %s49, 1
      %p515 = por %p513, %p514
      %p516 = scmp.ne.s32.totalorder %s505, %s506
      %p517 = scmp.eq.s32.totalorder %s49, 0
      %p518 = por %p516, %p517
      %p519 = scmp.ne.s32.totalorder %s505, %s506
      %p520 = scmp.eq.s32.totalorder %s50, 1
      %p521 = por %p519, %p520
      %p523 = scmp.ne.s32.totalorder %s506, %s522
      %p524 = scmp.eq.s32.totalorder %s50, 0
      %p525 = por %p523, %p524
      %s526 = sadd.s32 %s51, %s52
      %s527 = sadd.s32 %s63, %s59
      %s528 = ssub.s32 %s526, %s527
      %p529 = scmp.eq.s32.totalorder %s528, 0
      %s531 = sadd.s32 %s530, 1
      %s532 = scalar_select %p529, %s530, %s531
      %p535 = pneg %p529
      %p536 = scmp.eq.s32.totalorder %s44, 1
      %p537 = por %p535, %p536
      %p538 = scmp.ne.s32.totalorder %s530, %s533
      %p539 = scmp.eq.s32.totalorder %s44, 0
      %p540 = por %p538, %p539
      %p541 = scmp.ne.s32.totalorder %s530, %s533
      %p542 = scmp.eq.s32.totalorder %s49, 1
      %p543 = por %p541, %p542
      %p544 = scmp.ne.s32.totalorder %s533, %s534
      %p545 = scmp.eq.s32.totalorder %s49, 0
      %p546 = por %p544, %p545
      %p547 = scmp.ne.s32.totalorder %s533, %s534
      %p548 = scmp.eq.s32.totalorder %s50, 1
      %p549 = por %p547, %p548
      %p551 = scmp.ne.s32.totalorder %s534, %s550
      %p552 = scmp.eq.s32.totalorder %s50, 0
      %p553 = por %p551, %p552
      %s554 = ssub.s32 %s51, %s63
      %p555 = scmp.eq.s32.totalorder %s554, 0
      %s557 = sadd.s32 %s556, 1
      %s558 = scalar_select %p555, %s556, %s557
      %p561 = pneg %p555
      %p562 = scmp.eq.s32.totalorder %s44, 1
      %p563 = por %p561, %p562
      %p564 = scmp.ne.s32.totalorder %s556, %s559
      %p565 = scmp.eq.s32.totalorder %s44, 0
      %p566 = por %p564, %p565
      %p567 = scmp.ne.s32.totalorder %s556, %s559
      %p568 = scmp.eq.s32.totalorder %s49, 1
      %p569 = por %p567, %p568
      %p570 = scmp.ne.s32.totalorder %s559, %s560
      %p571 = scmp.eq.s32.totalorder %s49, 0
      %p572 = por %p570, %p571
      %p573 = scmp.ne.s32.totalorder %s559, %s560
      %p574 = scmp.eq.s32.totalorder %s50, 1
      %p575 = por %p573, %p574
      %p577 = scmp.ne.s32.totalorder %s560, %s576
      %p578 = scmp.eq.s32.totalorder %s50, 0
      %p579 = por %p577, %p578
      %s580 = ssub.s32 %s51, %s63
      %p581 = scmp.eq.s32.totalorder %s580, 0
      %s583 = sadd.s32 %s582, 1
      %s584 = scalar_select %p581, %s582, %s583
      %p587 = pneg %p581
      %p588 = scmp.eq.s32.totalorder %s44, 1
      %p589 = por %p587, %p588
      %p590 = scmp.ne.s32.totalorder %s582, %s585
      %p591 = scmp.eq.s32.totalorder %s44, 0
      %p592 = por %p590, %p591
      %p593 = scmp.ne.s32.totalorder %s582, %s585
      %p594 = scmp.eq.s32.totalorder %s49, 1
      %p595 = por %p593, %p594
      %p596 = scmp.ne.s32.totalorder %s585, %s586
      %p597 = scmp.eq.s32.totalorder %s49, 0
      %p598 = por %p596, %p597
      %p599 = scmp.ne.s32.totalorder %s585, %s586
      %p600 = scmp.eq.s32.totalorder %s50, 1
      %p601 = por %p599, %p600
      %p603 = scmp.ne.s32.totalorder %s586, %s602
      %p604 = scmp.eq.s32.totalorder %s50, 0
      %p605 = por %p603, %p604
      %s606 = ssub.s32 %s51, %s63
      %p607 = scmp.eq.s32.totalorder %s606, 0
      %s609 = sadd.s32 %s608, 1
      %s610 = scalar_select %p607, %s608, %s609
      %p613 = pneg %p607
      %p614 = scmp.eq.s32.totalorder %s44, 1
      %p615 = por %p613, %p614
      %p616 = scmp.ne.s32.totalorder %s608, %s611
      %p617 = scmp.eq.s32.totalorder %s44, 0
      %p618 = por %p616, %p617
      %p619 = scmp.ne.s32.totalorder %s608, %s611
      %p620 = scmp.eq.s32.totalorder %s49, 1
      %p621 = por %p619, %p620
      %p622 = scmp.ne.s32.totalorder %s611, %s612
      %p623 = scmp.eq.s32.totalorder %s49, 0
      %p624 = por %p622, %p623
      %p625 = scmp.ne.s32.totalorder %s611, %s612
      %p626 = scmp.eq.s32.totalorder %s50, 1
      %p627 = por %p625, %p626
      %p629 = scmp.ne.s32.totalorder %s612, %s628
      %p630 = scmp.eq.s32.totalorder %s50, 0
      %p631 = por %p629, %p630
      %s632 = ssub.s32 %s51, %s63
      %p633 = scmp.eq.s32.totalorder %s632, 0
      %s635 = sadd.s32 %s634, 1
      %s636 = scalar_select %p633, %s634, %s635
      %p639 = pneg %p633
      %p640 = scmp.eq.s32.totalorder %s44, 1
      %p641 = por %p639, %p640
      %p642 = scmp.ne.s32.totalorder %s634, %s637
      %p643 = scmp.eq.s32.totalorder %s44, 0
      %p644 = por %p642, %p643
      %p645 = scmp.ne.s32.totalorder %s634, %s637
      %p646 = scmp.eq.s32.totalorder %s49, 1
      %p647 = por %p645, %p646
      %p648 = scmp.ne.s32.totalorder %s637, %s638
      %p649 = scmp.eq.s32.totalorder %s49, 0
      %p650 = por %p648, %p649
      %p651 = scmp.ne.s32.totalorder %s637, %s638
      %p652 = scmp.eq.s32.totalorder %s50, 1
      %p653 = por %p651, %p652
      %p655 = scmp.ne.s32.totalorder %s638, %s654
      %p656 = scmp.eq.s32.totalorder %s50, 0
      %p657 = por %p655, %p656
      %p658 = scmp.le.s32.totalorder 1, %s44
      %p659 = scmp.lt.s32.totalorder %s44, 3
      %p660 = pnand %p658, %p659
      %p661 = pneg %p660
      // Predicated region
      $region9: #{tpu_custom_call.1} parent=5 // pred_check
        _
      $region10: #{tpu_custom_call.1} parent=5 // pred_check_branch
        %663 = sbr.rel (%p660) target = $region12
      $region11: #{tpu_custom_call.1} parent=5 // pred_region
        %s664 = ssub.s32 %s44, 1
        // Predicated region
        $region13: #{tpu_custom_call.1} parent=11 // pred_check
          %p665 = pneg %p84
        $region14: #{tpu_custom_call.1} parent=11 // pred_check_branch
          %667 = sbr.rel (%p665) target = $region16
        $region15: #{tpu_custom_call.1} parent=11 // pred_region
          %s668 = sld [smem:[#allocation3]]
          %p669 = scmp.lt.s32.totalorder %s668, 15
          %s670 = scalar_select %p669, %s668, 15
          %s671 = scalar_lea.vmem %s1, %s670
          %s672 = sld [smem:[#allocation3]]
        $region16: #{tpu_custom_call.1} parent=11 // pred_fallthru
          _
        // Predicated region
        $region17: #{tpu_custom_call.1} parent=11 // pred_check
          %p673 = pneg %p105
        $region18: #{tpu_custom_call.1} parent=11 // pred_check_branch
          %675 = sbr.rel (%p673) target = $region20
        $region19: #{tpu_custom_call.1} parent=11 // pred_region
          %s677 = ssub.s32 16, 16
          %678 = vsyncadd [#allocation5], %s677
          %s680 = sshll.u32 [#allocation4], 4
          %s681 = int_to_ptr.vmem [resolvable:$true] %s680
          %683 = dma.hbm_to_vmem [thread:$0]  %s2, 16, %s681, [#allocation5]
        $region20: #{tpu_custom_call.1} parent=11 // pred_fallthru
          _
        // Predicated region
        $region21: #{tpu_custom_call.1} parent=11 // pred_check
          %p684 = pneg %p126
        $region22: #{tpu_custom_call.1} parent=11 // pred_check_branch
          %686 = sbr.rel (%p684) target = $region24
        $region23: #{tpu_custom_call.1} parent=11 // pred_region
          _
        $region24: #{tpu_custom_call.1} parent=11 // pred_fallthru
          _
        // Predicated region
        $region25: #{tpu_custom_call.1} parent=11 // pred_check
          %p687 = pneg %p147
        $region26: #{tpu_custom_call.1} parent=11 // pred_check_branch
          %689 = sbr.rel (%p687) target = $region28
        $region27: #{tpu_custom_call.1} parent=11 // pred_region
          _
        $region28: #{tpu_custom_call.1} parent=11 // pred_fallthru
          _
        // Predicated region
        $region29: #{tpu_custom_call.1} parent=11 // pred_check
          %p690 = pneg %p168
        $region30: #{tpu_custom_call.1} parent=11 // pred_check_branch
          %692 = sbr.rel (%p690) target = $region32
        $region31: #{tpu_custom_call.1} parent=11 // pred_region
          _
        $region32: #{tpu_custom_call.1} parent=11 // pred_fallthru
          _
        // Predicated region
        $region33: #{tpu_custom_call.1} parent=11 // pred_check
          %p693 = pneg %p189
        $region34: #{tpu_custom_call.1} parent=11 // pred_check_branch
          %695 = sbr.rel (%p693) target = $region36
        $region35: #{tpu_custom_call.1} parent=11 // pred_region
          %s697 = ssub.s32 16, 16
          %698 = vsyncadd [#allocation8], %s697
          %s700 = sshll.u32 [#allocation7], 4
          %s701 = int_to_ptr.vmem [resolvable:$true] %s700
          %703 = dma.hbm_to_vmem [thread:$0]  %s6, 16, %s701, [#allocation8]
        $region36: #{tpu_custom_call.1} parent=11 // pred_fallthru
          _
        // Predicated region
        $region37: #{tpu_custom_call.1} parent=11 // pred_check
          %p704 = pneg %p210
        $region38: #{tpu_custom_call.1} parent=11 // pred_check_branch
          %706 = sbr.rel (%p704) target = $region40
        $region39: #{tpu_custom_call.1} parent=11 // pred_region
          _
        $region40: #{tpu_custom_call.1} parent=11 // pred_fallthru
          _
        // Predicated region
        $region41: #{tpu_custom_call.1} parent=11 // pred_check
          %p707 = pneg %p231
        $region42: #{tpu_custom_call.1} parent=11 // pred_check_branch
          %709 = sbr.rel (%p707) target = $region44
        $region43: #{tpu_custom_call.1} parent=11 // pred_region
          _
        $region44: #{tpu_custom_call.1} parent=11 // pred_fallthru
          _
        // Predicated region
        $region45: #{tpu_custom_call.1} parent=11 // pred_check
          %p710 = pneg %p252
        $region46: #{tpu_custom_call.1} parent=11 // pred_check_branch
          %712 = sbr.rel (%p710) target = $region48
        $region47: #{tpu_custom_call.1} parent=11 // pred_region
          %s714 = ssub.s32 16, 16
          %715 = vsyncadd [#allocation8], %s714
          %s717 = sshll.u32 [#allocation9], 4
          %s718 = int_to_ptr.vmem [resolvable:$true] %s717
          %720 = dma.hbm_to_vmem [thread:$0]  %s9, 16, %s718, [#allocation8]
        $region48: #{tpu_custom_call.1} parent=11 // pred_fallthru
          _
        // Predicated region
        $region49: #{tpu_custom_call.1} parent=11 // pred_check
          %p721 = pneg %p273
        $region50: #{tpu_custom_call.1} parent=11 // pred_check_branch
          %723 = sbr.rel (%p721) target = $region52
        $region51: #{tpu_custom_call.1} parent=11 // pred_region
          _
        $region52: #{tpu_custom_call.1} parent=11 // pred_fallthru
          _
        // Predicated region
        $region53: #{tpu_custom_call.1} parent=11 // pred_check
          %p724 = pneg %p294
        $region54: #{tpu_custom_call.1} parent=11 // pred_check_branch
          %726 = sbr.rel (%p724) target = $region56
        $region55: #{tpu_custom_call.1} parent=11 // pred_region
          _
        $region56: #{tpu_custom_call.1} parent=11 // pred_fallthru
          _
        // Predicated region
        $region57: #{tpu_custom_call.1} parent=11 // pred_check
          %p727 = pneg %p315
        $region58: #{tpu_custom_call.1} parent=11 // pred_check_branch
          %729 = sbr.rel (%p727) target = $region60
        $region59: #{tpu_custom_call.1} parent=11 // pred_region
          %s731 = ssub.s32 256, 256
          %732 = vsyncadd [#allocation11], %s731
          %s733 = sshll.u32 [#allocation10], 4
          %s734 = int_to_ptr.vmem [resolvable:$true] %s733
          %739 = dma.hbm_to_vmem [thread:$0]  %s12, 256, %s734, [#allocation11], 64, 64, 4
        $region60: #{tpu_custom_call.1} parent=11 // pred_fallthru
          _
        // Predicated region
        $region61: #{tpu_custom_call.1} parent=11 // pred_check
          %p740 = pneg %p336
        $region62: #{tpu_custom_call.1} parent=11 // pred_check_branch
          %742 = sbr.rel (%p740) target = $region64
        $region63: #{tpu_custom_call.1} parent=11 // pred_region
          %s744 = ssub.s32 256, 256
          %745 = vsyncadd [#allocation11], %s744
          %s746 = sshll.u32 [#allocation12], 4
          %s747 = int_to_ptr.vmem [resolvable:$true] %s746
          %752 = dma.hbm_to_vmem [thread:$0]  %s13, 256, %s747, [#allocation11], 64, 64, 4
        $region64: #{tpu_custom_call.1} parent=11 // pred_fallthru
          _
        // Predicated region
        $region65: #{tpu_custom_call.1} parent=11 // pred_check
          %p753 = pneg %p357
        $region66: #{tpu_custom_call.1} parent=11 // pred_check_branch
          %755 = sbr.rel (%p753) target = $region68
        $region67: #{tpu_custom_call.1} parent=11 // pred_region
          %s757 = ssub.s32 256, 256
          %758 = vsyncadd [#allocation14], %s757
          %s759 = sshll.u32 [#allocation13], 4
          %s760 = int_to_ptr.vmem [resolvable:$true] %s759
          %765 = dma.hbm_to_vmem [thread:$0]  %s14, 256, %s760, [#allocation14], 64, 64, 4
        $region68: #{tpu_custom_call.1} parent=11 // pred_fallthru
          _
        // Predicated region
        $region69: #{tpu_custom_call.1} parent=11 // pred_check
          %p766 = pneg %p378
        $region70: #{tpu_custom_call.1} parent=11 // pred_check_branch
          %768 = sbr.rel (%p766) target = $region72
        $region71: #{tpu_custom_call.1} parent=11 // pred_region
          _
        $region72: #{tpu_custom_call.1} parent=11 // pred_fallthru
          _
        // Predicated region
        $region73: #{tpu_custom_call.1} parent=11 // pred_check
          %p769 = pneg %p399
        $region74: #{tpu_custom_call.1} parent=11 // pred_check_branch
          %771 = sbr.rel (%p769) target = $region76
        $region75: #{tpu_custom_call.1} parent=11 // pred_region
          _
        $region76: #{tpu_custom_call.1} parent=11 // pred_fallthru
          _
        // Predicated region
        $region77: #{tpu_custom_call.1} parent=11 // pred_check
          %p772 = pneg %p420
        $region78: #{tpu_custom_call.1} parent=11 // pred_check_branch
          %774 = sbr.rel (%p772) target = $region80
        $region79: #{tpu_custom_call.1} parent=11 // pred_region
          _
        $region80: #{tpu_custom_call.1} parent=11 // pred_fallthru
          _
        // Predicated region
        $region81: #{tpu_custom_call.1} parent=11 // pred_check
          %p775 = pneg %p441
        $region82: #{tpu_custom_call.1} parent=11 // pred_check_branch
          %777 = sbr.rel (%p775) target = $region84
        $region83: #{tpu_custom_call.1} parent=11 // pred_region
          _
        $region84: #{tpu_custom_call.1} parent=11 // pred_fallthru
          _
        // Predicated region
        $region85: #{tpu_custom_call.1} parent=11 // pred_check
          %p778 = pneg %p462
        $region86: #{tpu_custom_call.1} parent=11 // pred_check_branch
          %780 = sbr.rel (%p778) target = $region88
        $region87: #{tpu_custom_call.1} parent=11 // pred_region
          _
        $region88: #{tpu_custom_call.1} parent=11 // pred_fallthru
          _
      $region12: #{tpu_custom_call.1} parent=5 // pred_fallthru
        _
      %p781 = scmp.lt.s32.totalorder %s44, 2
      // Predicated region
      $region89: #{tpu_custom_call.1} parent=5 // pred_check
        %p782 = pneg %p781
      $region90: #{tpu_custom_call.1} parent=5 // pred_check_branch
        %784 = sbr.rel (%p782) target = $region92
      $region91: #{tpu_custom_call.1} parent=5 // pred_region
        // Predicated region
        $region93: #{tpu_custom_call.1} parent=91 // pred_check
          %p785 = pneg %p484
        $region94: #{tpu_custom_call.1} parent=91 // pred_check_branch
          %787 = sbr.rel (%p785) target = $region96
        $region95: #{tpu_custom_call.1} parent=91 // pred_region
          %s788 = sand.u32 %s474, 1
          %s789 = sand.u32 %s474, 1
          %s790 = smul.addr %s789, 16
          %s791 = scalar_lea.vmem [#allocation15], %s790
          %s792 = sadd.s32 %s51, %s52
          %s793 = smul.addr %s792, 4
          %s794 = scalar_lea.vmem %s20, %s793
          // Predicated region
          $region97: #{tpu_custom_call.1} parent=95 // pred_check
            _
          $region98: #{tpu_custom_call.1} parent=95 // pred_check_branch
            %796 = sbr.rel (0) target = $region100
          $region99: #{tpu_custom_call.1} parent=95 // pred_region
            // Predicated region
            $region101: #{tpu_custom_call.1} parent=99 // pred_check
              _
            $region102: #{tpu_custom_call.1} parent=99 // pred_check_branch
              %798 = sbr.rel target = $region104
            $region103: #{tpu_custom_call.1} parent=99 // pred_region
              // Predicated region
              $region116: #{tpu_custom_call.1} parent=103 // pred_check
                _
              $region117: #{tpu_custom_call.1} parent=103 // pred_check_branch
                %819 = sbr.rel (0) target = $region119
              $region118: #{tpu_custom_call.1} parent=103 // pred_region
                loop: start=0, step=1, limit=1
                $region120: #{tpu_custom_call.1} parent=118 // loop_pre_header
                  _
                $region121: #{tpu_custom_call.1} parent=118 // loop_header
                  %s821 = sphi 0, %s825
                  %p822 = scmp.ge.s32.totalorder %s821, 1
                  %s826 = sphi %s794, %s794
                  %s827 = sphi %s791, %s791
                $region122: #{tpu_custom_call.1} parent=118 // loop_header_branch
                  %824 = sbr.rel (%p822) target = $region126
                $region123: #{tpu_custom_call.1} parent=118 // loop_body
                  _
                $region124: #{tpu_custom_call.1} parent=118 // loop_footer
                  %s825 = sadd.s32 1, %s821
                $region125: #{tpu_custom_call.1} parent=118 // loop_footer_branch
                  %820 = sbr.rel target = $region121
                $region126: #{tpu_custom_call.1} parent=118 // loop_exit
                  _
                loop: start=0, step=1, limit=1
                $region127: #{tpu_custom_call.1} parent=118 // loop_pre_header
                  _
                $region128: #{tpu_custom_call.1} parent=118 // loop_header
                  %s830 = sphi 0, %s834
                  %p831 = scmp.ge.s32.totalorder %s830, 1
                  %s835 = sphi %s794, %s794
                  %s836 = sphi %s791, %s791
                $region129: #{tpu_custom_call.1} parent=118 // loop_header_branch
                  %833 = sbr.rel (%p831) target = $region133
                $region130: #{tpu_custom_call.1} parent=118 // loop_body
                  %v837 = vld [vmem:[%s835] sm:$0xf]
                  %838 = vst [vmem:[%s836] sm:$0xf] %v837
                  %v839 = vld [vmem:[%s835 + $0x8] sm:$0xf]
                  %840 = vst [vmem:[%s836 + $0x4] sm:$0xf] %v839
                  %v841 = vld [vmem:[%s835 + $0x10] sm:$0xf]
                  %842 = vst [vmem:[%s836 + $0x8] sm:$0xf] %v841
                  %v843 = vld [vmem:[%s835 + $0x18] sm:$0xf]
                  %844 = vst [vmem:[%s836 + $0xc] sm:$0xf] %v843
                $region131: #{tpu_custom_call.1} parent=118 // loop_footer
                  %s834 = sadd.s32 1, %s830
                $region132: #{tpu_custom_call.1} parent=118 // loop_footer_branch
                  %829 = sbr.rel target = $region128
                $region133: #{tpu_custom_call.1} parent=118 // loop_exit
                  _
              $region119: #{tpu_custom_call.1} parent=103 // pred_fallthru
                _
            $region104: #{tpu_custom_call.1} parent=99 // pred_fallthru
              _
            // Predicated region
            $region105: #{tpu_custom_call.1} parent=99 // pred_check
              _
            $region106: #{tpu_custom_call.1} parent=99 // pred_check_branch
              %800 = sbr.rel (0) target = $region108
            $region107: #{tpu_custom_call.1} parent=99 // pred_region
              loop: start=0, step=1, limit=1
              $region109: #{tpu_custom_call.1} parent=107 // loop_pre_header
                _
              $region110: #{tpu_custom_call.1} parent=107 // loop_header
                %s803 = sphi 0, %s807
                %p804 = scmp.ge.s32.totalorder %s803, 1
                %s808 = sphi %s794, %s794
                %s809 = sphi %s791, %s791
              $region111: #{tpu_custom_call.1} parent=107 // loop_header_branch
                %806 = sbr.rel (%p804) target = $region115
              $region112: #{tpu_custom_call.1} parent=107 // loop_body
                %v810 = vld [vmem:[%s808] sm:$0xf]
                %811 = vst [vmem:[%s809] sm:$0xf] %v810
                %v812 = vld [vmem:[%s808 + $0x8] sm:$0xf]
                %813 = vst [vmem:[%s809 + $0x4] sm:$0xf] %v812
                %v814 = vld [vmem:[%s808 + $0x10] sm:$0xf]
                %815 = vst [vmem:[%s809 + $0x8] sm:$0xf] %v814
                %v816 = vld [vmem:[%s808 + $0x18] sm:$0xf]
                %817 = vst [vmem:[%s809 + $0xc] sm:$0xf] %v816
              $region113: #{tpu_custom_call.1} parent=107 // loop_footer
                %s807 = sadd.s32 1, %s803
              $region114: #{tpu_custom_call.1} parent=107 // loop_footer_branch
                %802 = sbr.rel target = $region110
              $region115: #{tpu_custom_call.1} parent=107 // loop_exit
                _
            $region108: #{tpu_custom_call.1} parent=99 // pred_fallthru
              _
          $region100: #{tpu_custom_call.1} parent=95 // pred_fallthru
            _
          %845 = vnop
        $region96: #{tpu_custom_call.1} parent=91 // pred_fallthru
          _
        // Predicated region
        $region134: #{tpu_custom_call.1} parent=91 // pred_check
          %p846 = pneg %p512
        $region135: #{tpu_custom_call.1} parent=91 // pred_check_branch
          %848 = sbr.rel (%p846) target = $region137
        $region136: #{tpu_custom_call.1} parent=91 // pred_region
          %s849 = sadd.s32 %s51, %s52
          %p850 = scmp.lt.s32.totalorder %s849, 1
          %s851 = scalar_select %p850, %s849, 1
          %s852 = scalar_lea.vmem %s21, %s851
          %s853 = sadd.s32 %s51, %s52
        $region137: #{tpu_custom_call.1} parent=91 // pred_fallthru
          _
      $region92: #{tpu_custom_call.1} parent=5 // pred_fallthru
        _
      %p854 = scmp.le.s32.totalorder 1, %s44
      %p855 = scmp.lt.s32.totalorder %s44, 3
      %p856 = pnand %p854, %p855
      %p857 = pneg %p856
      // Predicated region
      $region138: #{tpu_custom_call.1} parent=5 // pred_check
        _
      $region139: #{tpu_custom_call.1} parent=5 // pred_check_branch
        %859 = sbr.rel (%p856) target = $region141
      $region140: #{tpu_custom_call.1} parent=5 // pred_region
        %s860 = ssub.s32 %s44, 1
        // Predicated region
        $region142: #{tpu_custom_call.1} parent=140 // pred_check
          %p861 = pneg %p105
        $region143: #{tpu_custom_call.1} parent=140 // pred_check_branch
          %863 = sbr.rel (%p861) target = $region145
        $region144: #{tpu_custom_call.1} parent=140 // pred_region
          %864 = dma.done [#allocation5], 16
        $region145: #{tpu_custom_call.1} parent=140 // pred_fallthru
          _
        // Predicated region
        $region146: #{tpu_custom_call.1} parent=140 // pred_check
          %p865 = pneg %p189
        $region147: #{tpu_custom_call.1} parent=140 // pred_check_branch
          %867 = sbr.rel (%p865) target = $region149
        $region148: #{tpu_custom_call.1} parent=140 // pred_region
          %868 = dma.done [#allocation8], 16
        $region149: #{tpu_custom_call.1} parent=140 // pred_fallthru
          _
        // Predicated region
        $region150: #{tpu_custom_call.1} parent=140 // pred_check
          %p869 = pneg %p252
        $region151: #{tpu_custom_call.1} parent=140 // pred_check_branch
          %871 = sbr.rel (%p869) target = $region153
        $region152: #{tpu_custom_call.1} parent=140 // pred_region
          %872 = dma.done [#allocation8], 16
        $region153: #{tpu_custom_call.1} parent=140 // pred_fallthru
          _
        // Predicated region
        $region154: #{tpu_custom_call.1} parent=140 // pred_check
          %p873 = pneg %p315
        $region155: #{tpu_custom_call.1} parent=140 // pred_check_branch
          %875 = sbr.rel (%p873) target = $region157
        $region156: #{tpu_custom_call.1} parent=140 // pred_region
          %876 = dma.done [#allocation11], 256
        $region157: #{tpu_custom_call.1} parent=140 // pred_fallthru
          _
        // Predicated region
        $region158: #{tpu_custom_call.1} parent=140 // pred_check
          %p877 = pneg %p336
        $region159: #{tpu_custom_call.1} parent=140 // pred_check_branch
          %879 = sbr.rel (%p877) target = $region161
        $region160: #{tpu_custom_call.1} parent=140 // pred_region
          %880 = dma.done [#allocation11], 256
        $region161: #{tpu_custom_call.1} parent=140 // pred_fallthru
          _
        // Predicated region
        $region162: #{tpu_custom_call.1} parent=140 // pred_check
          %p881 = pneg %p357
        $region163: #{tpu_custom_call.1} parent=140 // pred_check_branch
          %883 = sbr.rel (%p881) target = $region165
        $region164: #{tpu_custom_call.1} parent=140 // pred_region
          %884 = dma.done [#allocation14], 256
        $region165: #{tpu_custom_call.1} parent=140 // pred_fallthru
          _
        %s885 = sand.u32 %s477, 1
        %s886 = sand.u32 %s477, 1
        %s887 = smul.addr %s886, 16
        %s888 = scalar_lea.vmem [#allocation15], %s887
        // Predicated region
        $region166: #{tpu_custom_call.1} parent=140 // pred_check
          %p889 = pneg %p490
        $region167: #{tpu_custom_call.1} parent=140 // pred_check_branch
          %891 = sbr.rel (%p889) target = $region169
        $region168: #{tpu_custom_call.1} parent=140 // pred_region
          _
        $region169: #{tpu_custom_call.1} parent=140 // pred_fallthru
          _
        %s892 = sld [smem:[#allocation3]]
        %p893 = scmp.lt.s32.totalorder %s892, 15
        %s894 = scalar_select %p893, %s892, 15
        %s895 = scalar_lea.vmem %s1, %s894
        %p896 = pneg %p84
        %p897 = pneg %p81
        %p898 = pneg %p105
        %p899 = pneg %p102
        %p900 = pneg %p126
        %p901 = pneg %p123
        %p902 = pneg %p147
        %p903 = pneg %p144
        %p904 = pneg %p168
        %p905 = pneg %p165
        %p906 = pneg %p189
        %p907 = pneg %p186
        %p908 = pneg %p210
        %p909 = pneg %p207
        %p910 = pneg %p231
        %p911 = pneg %p228
        %p912 = pneg %p252
        %p913 = pneg %p249
        %p914 = pneg %p273
        %p915 = pneg %p270
        %p916 = pneg %p294
        %p917 = pneg %p291
        %p918 = pneg %p315
        %p919 = pneg %p312
        %p920 = pneg %p336
        %p921 = pneg %p333
        %p922 = pneg %p357
        %p923 = pneg %p354
        %p924 = pneg %p378
        %p925 = pneg %p375
        %p926 = pneg %p399
        %p927 = pneg %p396
        %p928 = pneg %p420
        %p929 = pneg %p417
        %p930 = pneg %p441
        %p931 = pneg %p438
        %p932 = pneg %p462
        %p933 = pneg %p459
        %s934 = sand.u32 %s477, 1
        %s935 = sand.u32 %s477, 1
        %s936 = smul.addr %s935, 16
        %s937 = scalar_lea.vmem [#allocation15], %s936
        %p938 = pneg %p490
        %p939 = pneg %p487
        %s940 = sadd.s32 %s53, %s54
        %p941 = scmp.lt.s32.totalorder %s940, 1
        %s942 = scalar_select %p941, %s940, 1
        %s943 = scalar_lea.vmem %s21, %s942
        %p944 = pneg %p518
        %p945 = pneg %p515
        %p946 = pneg %p546
        %p947 = pneg %p543
        %s948 = sand.u32 %s533, 1
        %s949 = scalar_lea.sflag [#allocation6], %s948
        %s950 = sand.u32 %s533, 1
        %s951 = scalar_lea.vmem [#allocation16], %s950
        %p952 = pneg %p572
        %p953 = pneg %p569
        %s954 = sand.u32 %s49, 1
        %s955 = scalar_lea.sflag [#allocation18], %s954
        %s956 = sand.u32 %s559, 1
        %s957 = scalar_lea.vmem [#allocation17], %s956
        %p958 = pneg %p598
        %p959 = pneg %p595
        %s960 = sand.u32 %s49, 1
        %s961 = scalar_lea.sflag [#allocation18], %s960
        %s962 = sand.u32 %s585, 1
        %s963 = scalar_lea.vmem [#allocation19], %s962
        %p964 = pneg %p624
        %p965 = pneg %p621
        %p966 = scmp.lt.s32.totalorder %s53, 1
        %s967 = scalar_select %p966, %s53, 1
        %s968 = scalar_lea.vmem %s25, %s967
        %p969 = pneg %p650
        %p970 = pneg %p647
        %p971 = scmp.lt.s32.totalorder %s53, 1
        %s972 = scalar_select %p971, %s53, 1
        %s973 = scalar_lea.vmem %s26, %s972
        %s974 = sld [smem:[#allocation3]]
        %p975 = scmp.lt.s32.totalorder %s974, 15
        %s976 = scalar_select %p975, %s974, 15
        %s977 = scalar_lea.vmem %s1, %s976
        %s978 = sld [smem:[#allocation3]]
        %s979 = sadd.s32 %s53, %s54
        %s980 = sadd.s32 %s53, %s54
        %p981 = scmp.lt.s32.totalorder %s980, 1
        %s982 = scalar_select %p981, %s980, 1
        %s983 = scalar_lea.vmem %s21, %s982
        %s984 = sadd.s32 %s53, %s54
        %s985 = sadd.s32 %s53, %s54
        %p986 = scmp.lt.s32.totalorder %s53, 1
        %s987 = scalar_select %p986, %s53, 1
        %s988 = scalar_lea.vmem %s25, %s987
        %p989 = scmp.lt.s32.totalorder %s53, 1
        %s990 = scalar_select %p989, %s53, 1
        %s991 = scalar_lea.vmem %s26, %s990
        %p993 = scmp.eq.s32.totalorder %s54, 0
        // Predicated region
        $region170: #{tpu_custom_call.1} parent=140 // pred_check
          %p994 = pneg %p993
        $region171: #{tpu_custom_call.1} parent=140 // pred_check_branch
          %996 = sbr.rel (%p994) target = $region173
        $region172: #{tpu_custom_call.1} parent=140 // pred_region
          %v997 = vld [vmem:[%s977] sm:$0x1]
          %v998 = vld [vmem:[#allocation4] sm:$0x1]
          %v999 = vpack.c.bf16 %v998, %v998
          %v1000 = vld [vmem:[%s4] sm:$0xf]
          %v1001 = vld [vmem:[%s4 + $0x4] sm:$0xf]
          %v1002 = vld [vmem:[%s4 + $0x8] sm:$0xf]
          %v1003 = vld [vmem:[%s4 + $0xc] sm:$0xf]
          %v1004 = vld [vmem:[%s5] sm:$0xf]
          %v1005 = vld [vmem:[%s5 + $0x4] sm:$0xf]
          %v1006 = vld [vmem:[%s5 + $0x8] sm:$0xf]
          %v1007 = vld [vmem:[%s5 + $0xc] sm:$0xf]
          %v1012 = vunpack.c.l.b16 %v1004
          %v1013 = vunpack.c.l.b16 %v1005
          %v1014 = vunpack.c.l.b16 %v1006
          %v1015 = vunpack.c.l.b16 %v1007
          %v1016 = vpack.c.b16 %v1013, %v1012
          %v1017 = vpack.c.b16 %v1015, %v1014
          %vm1020 = vcmask 261120
          %v1022 = vsel %vm1020, %v999, 0
          %1024 = vmatprep.subr.bf16.mxu0 0
          %1025 = vmatpush1.bf16.msra.mxu0 %v1016
          %1026 = vmatprep.subr.bf16.mxu0 0
          %1027 = vmatpush1.bf16.msra.mxu0 %v1017
          %1028 = vmatprep.subr.bf16.mxu0 0
          %1029 = vmatpush1.bf16.msra.mxu0 0
          %1030 = vmatprep.subr.bf16.mxu0 0
          %1031 = vmatpush1.bf16.msra.mxu0 0
          %1032 = vmatprep.subr.bf16.mxu0 0
          %1033 = vmatpush1.bf16.msra.mxu0 0
          %1034 = vmatprep.subr.bf16.mxu0 0
          %1035 = vmatpush1.bf16.msra.mxu0 0
          %1036 = vmatprep.subr.bf16.mxu0 0
          %1037 = vmatpush1.bf16.msra.mxu0 0
          %1038 = vmatprep.subr.bf16.mxu0 0
          %1039 = vmatpush1.bf16.msra.mxu0 0
          %1040 = vmatprep.subr.bf16.mxu0 0
          %1041 = vmatpush1.bf16.msra.mxu0 0
          %1042 = vmatprep.subr.bf16.mxu0 0
          %1043 = vmatpush1.bf16.msra.mxu0 0
          %1044 = vmatprep.subr.bf16.mxu0 0
          %1045 = vmatpush1.bf16.msra.mxu0 0
          %1046 = vmatprep.subr.bf16.mxu0 0
          %1047 = vmatpush1.bf16.msra.mxu0 0
          %1048 = vmatprep.subr.bf16.mxu0 0
          %1049 = vmatpush1.bf16.msra.mxu0 0
          %1050 = vmatprep.subr.bf16.mxu0 0
          %1051 = vmatpush1.bf16.msra.mxu0 0
          %1052 = vmatprep.subr.bf16.mxu0 0
          %1053 = vmatpush1.bf16.msra.mxu0 0
          %1054 = vmatprep.subr.bf16.mxu0 0
          %1055 = vmatpush1.bf16.msra.mxu0 0
          %1056 = vmatprep.mubr.bf16.mxu0 0
          %1057 = vmatmul.mubr.bf16.gmra.mrb[0].mxu0 %v1022
          %v1058 = vpop.f32.mrb[0].mxu0
          %v1059 = vadd.f32 0.0, %v1058
          %v1060 = vpop.f32.mrb[0].mxu0
          %v1061 = vpop.f32.mrb[0].mxu0
          %v1062 = vpop.f32.mrb[0].mxu0
          %1063 = vdwg.mxu0
          %v1068 = vunpack.c.l.b16 %v1000
          %v1069 = vunpack.c.l.b16 %v1001
          %v1070 = vunpack.c.l.b16 %v1002
          %v1071 = vunpack.c.l.b16 %v1003
          %v1072 = vpack.c.b16 %v1069, %v1068
          %v1073 = vpack.c.b16 %v1071, %v1070
          %v1077 = vsel %vm1020, %v997, 0
          %1079 = vmatprep.subr.bf16.mxu0 0
          %1080 = vmatpush1.bf16.msra.mxu0 %v1072
          %1081 = vmatprep.subr.bf16.mxu0 0
          %1082 = vmatpush1.bf16.msra.mxu0 %v1073
          %1083 = vmatprep.subr.bf16.mxu0 0
          %1084 = vmatpush1.bf16.msra.mxu0 0
          %1085 = vmatprep.subr.bf16.mxu0 0
          %1086 = vmatpush1.bf16.msra.mxu0 0
          %1087 = vmatprep.subr.bf16.mxu0 0
          %1088 = vmatpush1.bf16.msra.mxu0 0
          %1089 = vmatprep.subr.bf16.mxu0 0
          %1090 = vmatpush1.bf16.msra.mxu0 0
          %1091 = vmatprep.subr.bf16.mxu0 0
          %1092 = vmatpush1.bf16.msra.mxu0 0
          %1093 = vmatprep.subr.bf16.mxu0 0
          %1094 = vmatpush1.bf16.msra.mxu0 0
          %1095 = vmatprep.subr.bf16.mxu0 0
          %1096 = vmatpush1.bf16.msra.mxu0 0
          %1097 = vmatprep.subr.bf16.mxu0 0
          %1098 = vmatpush1.bf16.msra.mxu0 0
          %1099 = vmatprep.subr.bf16.mxu0 0
          %1100 = vmatpush1.bf16.msra.mxu0 0
          %1101 = vmatprep.subr.bf16.mxu0 0
          %1102 = vmatpush1.bf16.msra.mxu0 0
          %1103 = vmatprep.subr.bf16.mxu0 0
          %1104 = vmatpush1.bf16.msra.mxu0 0
          %1105 = vmatprep.subr.bf16.mxu0 0
          %1106 = vmatpush1.bf16.msra.mxu0 0
          %1107 = vmatprep.subr.bf16.mxu0 0
          %1108 = vmatpush1.bf16.msra.mxu0 0
          %1109 = vmatprep.subr.bf16.mxu0 0
          %1110 = vmatpush1.bf16.msra.mxu0 0
          %1111 = vmatprep.mubr.bf16.mxu0 0
          %1112 = vmatmul.mubr.bf16.gmra.mrb[0].mxu0 %v1077
          %v1113 = vpop.f32.mrb[0].mxu0
          %v1114 = vadd.f32 %v1059, %v1113
          %v1115 = vpop.f32.mrb[0].mxu0
          %v1116 = vpop.f32.mrb[0].mxu0
          %v1117 = vpop.f32.mrb[0].mxu0
          %1118 = vdwg.mxu0
          %v1119 = vld [vmem:[#allocation7] sm:$0x1]
          %v1120 = vadd.f32 %v1114, %v1119
          %vm1121 = vcmask 73728
          %v1122 = vsel %vm1121, %v1120, -inf
          %1123 = vmax.xlane.f32.xlu0 %v1122
          %v1124 = vpop.xlane.xlu0 %1123
          %v1125 = vsub.f32 %v1120, %v1124
          %v1126 = vmul.f32 %v1125, 1.442695
          %v1127 = vpow.pop %v1126
          %v1128 = vsel %vm1121, %v1127, 0.0
          %1129 = vadd.xlane.f32.xlu0 %v1128
          %v1130 = vpop.xlane.xlu0 %1129
          %v1131 = vrcp.pop %v1130
          %v1132 = vmul.f32 %v1127, %v1131
          %1133 = vst.msk [vmem:[%s963] sm:$0x1] %vm1121, %v1132
          %v1134 = vld [vmem:[%s3] sm:$0xff]
          %v1135 = vld [vmem:[%s3 + $0x8] sm:$0x3]
          %vm1136 = vcmask 80896
          %v1138 = vsel %vm1136, %v1132, 0
          %vm1140 = vcmask 1041408
          %v1142 = vsel %vm1140, %v1135, 0
          %1144 = vmatprep.subr.mxu0 0.0
          %1145 = vmatpush1.msra.mxu0 %v1134
          %1146 = vmatprep.subr.mxu0 0.0
          %1147 = vmatpush1.msra.mxu0 %v1142
          %1148 = vmatprep.subr.mxu0 0.0
          %1149 = vmatpush1.msra.mxu0 0.0
          %1150 = vmatprep.subr.mxu0 0.0
          %1151 = vmatpush1.msra.mxu0 0.0
          %1152 = vmatprep.subr.mxu0 0.0
          %1153 = vmatpush1.msra.mxu0 0.0
          %1154 = vmatprep.subr.mxu0 0.0
          %1155 = vmatpush1.msra.mxu0 0.0
          %1156 = vmatprep.subr.mxu0 0.0
          %1157 = vmatpush1.msra.mxu0 0.0
          %1158 = vmatprep.subr.mxu0 0.0
          %1159 = vmatpush1.msra.mxu0 0.0
          %1160 = vmatprep.subr.mxu0 0.0
          %1161 = vmatpush1.msra.mxu0 0.0
          %1162 = vmatprep.subr.mxu0 0.0
          %1163 = vmatpush1.msra.mxu0 0.0
          %1164 = vmatprep.subr.mxu0 0.0
          %1165 = vmatpush1.msra.mxu0 0.0
          %1166 = vmatprep.subr.mxu0 0.0
          %1167 = vmatpush1.msra.mxu0 0.0
          %1168 = vmatprep.subr.mxu0 0.0
          %1169 = vmatpush1.msra.mxu0 0.0
          %1170 = vmatprep.subr.mxu0 0.0
          %1171 = vmatpush1.msra.mxu0 0.0
          %1172 = vmatprep.subr.mxu0 0.0
          %1173 = vmatpush1.msra.mxu0 0.0
          %1174 = vmatprep.subr.mxu0 0.0
          %1175 = vmatpush1.msra.mxu0 0.0
          %1176 = vmatprep.subr.mxu0 0.0
          %1177 = vmatpush1.msra.mxu0 0.0
          %1178 = vmatprep.subr.mxu0 0.0
          %1179 = vmatpush1.msra.mxu0 0.0
          %1180 = vmatprep.subr.mxu0 0.0
          %1181 = vmatpush1.msra.mxu0 0.0
          %1182 = vmatprep.subr.mxu0 0.0
          %1183 = vmatpush1.msra.mxu0 0.0
          %1184 = vmatprep.subr.mxu0 0.0
          %1185 = vmatpush1.msra.mxu0 0.0
          %1186 = vmatprep.subr.mxu0 0.0
          %1187 = vmatpush1.msra.mxu0 0.0
          %1188 = vmatprep.subr.mxu0 0.0
          %1189 = vmatpush1.msra.mxu0 0.0
          %1190 = vmatprep.subr.mxu0 0.0
          %1191 = vmatpush1.msra.mxu0 0.0
          %1192 = vmatprep.subr.mxu0 0.0
          %1193 = vmatpush1.msra.mxu0 0.0
          %1194 = vmatprep.subr.mxu0 0.0
          %1195 = vmatpush1.msra.mxu0 0.0
          %1196 = vmatprep.subr.mxu0 0.0
          %1197 = vmatpush1.msra.mxu0 0.0
          %1198 = vmatprep.subr.mxu0 0.0
          %1199 = vmatpush1.msra.mxu0 0.0
          %1200 = vmatprep.subr.mxu0 0.0
          %1201 = vmatpush1.msra.mxu0 0.0
          %1202 = vmatprep.subr.mxu0 0.0
          %1203 = vmatpush1.msra.mxu0 0.0
          %1204 = vmatprep.subr.mxu0 0.0
          %1205 = vmatpush1.msra.mxu0 0.0
          %1206 = vmatprep.subr.mxu0 0.0
          %1207 = vmatpush1.msra.mxu0 0.0
          %1208 = vmatprep.mubr.f32.mxu0 0.0
          %1209 = vmatmul.mubr.f32.gmra.mrb[0].mxu0 %v1138
          %v1210 = vpop.f32.mrb[0].mxu0
          %v1211 = vadd.f32 0.0, %v1210
          %v1212 = vpop.f32.mrb[0].mxu0
          %1213 = vdwg.mxu0
          %v1214 = vld [vmem:[%s7] sm:$0xf]
          %v1215 = vld [vmem:[%s7 + $0x4] sm:$0xf]
          %v1216 = vld [vmem:[%s7 + $0x8] sm:$0xf]
          %v1217 = vld [vmem:[%s7 + $0xc] sm:$0xf]
          %v1218 = vpack.c.bf16 %v1211, %v1211
          %v1219 = vld [vmem:[%s8] sm:$0xf]
          %v1220 = vld [vmem:[%s8 + $0x4] sm:$0xf]
          %v1221 = vld [vmem:[%s8 + $0x8] sm:$0xf]
          %v1222 = vld [vmem:[%s8 + $0xc] sm:$0xf]
          %v1227 = vunpack.c.l.b16 %v1219
          %v1228 = vunpack.c.l.b16 %v1220
          %v1229 = vunpack.c.l.b16 %v1221
          %v1230 = vunpack.c.l.b16 %v1222
          %v1231 = vpack.c.b16 %v1228, %v1227
          %v1232 = vpack.c.b16 %v1230, %v1229
          %v1236 = vsel %vm1020, %v1218, 0
          %1238 = vmatprep.subr.bf16.mxu0 0
          %1239 = vmatpush1.bf16.msra.mxu0 %v1231
          %1240 = vmatprep.subr.bf16.mxu0 0
          %1241 = vmatpush1.bf16.msra.mxu0 %v1232
          %1242 = vmatprep.subr.bf16.mxu0 0
          %1243 = vmatpush1.bf16.msra.mxu0 0
          %1244 = vmatprep.subr.bf16.mxu0 0
          %1245 = vmatpush1.bf16.msra.mxu0 0
          %1246 = vmatprep.subr.bf16.mxu0 0
          %1247 = vmatpush1.bf16.msra.mxu0 0
          %1248 = vmatprep.subr.bf16.mxu0 0
          %1249 = vmatpush1.bf16.msra.mxu0 0
          %1250 = vmatprep.subr.bf16.mxu0 0
          %1251 = vmatpush1.bf16.msra.mxu0 0
          %1252 = vmatprep.subr.bf16.mxu0 0
          %1253 = vmatpush1.bf16.msra.mxu0 0
          %1254 = vmatprep.subr.bf16.mxu0 0
          %1255 = vmatpush1.bf16.msra.mxu0 0
          %1256 = vmatprep.subr.bf16.mxu0 0
          %1257 = vmatpush1.bf16.msra.mxu0 0
          %1258 = vmatprep.subr.bf16.mxu0 0
          %1259 = vmatpush1.bf16.msra.mxu0 0
          %1260 = vmatprep.subr.bf16.mxu0 0
          %1261 = vmatpush1.bf16.msra.mxu0 0
          %1262 = vmatprep.subr.bf16.mxu0 0
          %1263 = vmatpush1.bf16.msra.mxu0 0
          %1264 = vmatprep.subr.bf16.mxu0 0
          %1265 = vmatpush1.bf16.msra.mxu0 0
          %1266 = vmatprep.subr.bf16.mxu0 0
          %1267 = vmatpush1.bf16.msra.mxu0 0
          %1268 = vmatprep.subr.bf16.mxu0 0
          %1269 = vmatpush1.bf16.msra.mxu0 0
          %1270 = vmatprep.mubr.bf16.mxu0 0
          %1271 = vmatmul.mubr.bf16.gmra.mrb[0].mxu0 %v1236
          %v1272 = vpop.f32.mrb[0].mxu0
          %v1273 = vadd.f32 0.0, %v1272
          %v1274 = vpop.f32.mrb[0].mxu0
          %v1275 = vpop.f32.mrb[0].mxu0
          %v1276 = vpop.f32.mrb[0].mxu0
          %1277 = vdwg.mxu0
          %v1282 = vunpack.c.l.b16 %v1214
          %v1283 = vunpack.c.l.b16 %v1215
          %v1284 = vunpack.c.l.b16 %v1216
          %v1285 = vunpack.c.l.b16 %v1217
          %v1286 = vpack.c.b16 %v1283, %v1282
          %v1287 = vpack.c.b16 %v1285, %v1284
          %1290 = vmatprep.subr.bf16.mxu0 0
          %1291 = vmatpush1.bf16.msra.mxu0 %v1286
          %1292 = vmatprep.subr.bf16.mxu0 0
          %1293 = vmatpush1.bf16.msra.mxu0 %v1287
          %1294 = vmatprep.subr.bf16.mxu0 0
          %1295 = vmatpush1.bf16.msra.mxu0 0
          %1296 = vmatprep.subr.bf16.mxu0 0
          %1297 = vmatpush1.bf16.msra.mxu0 0
          %1298 = vmatprep.subr.bf16.mxu0 0
          %1299 = vmatpush1.bf16.msra.mxu0 0
          %1300 = vmatprep.subr.bf16.mxu0 0
          %1301 = vmatpush1.bf16.msra.mxu0 0
          %1302 = vmatprep.subr.bf16.mxu0 0
          %1303 = vmatpush1.bf16.msra.mxu0 0
          %1304 = vmatprep.subr.bf16.mxu0 0
          %1305 = vmatpush1.bf16.msra.mxu0 0
          %1306 = vmatprep.subr.bf16.mxu0 0
          %1307 = vmatpush1.bf16.msra.mxu0 0
          %1308 = vmatprep.subr.bf16.mxu0 0
          %1309 = vmatpush1.bf16.msra.mxu0 0
          %1310 = vmatprep.subr.bf16.mxu0 0
          %1311 = vmatpush1.bf16.msra.mxu0 0
          %1312 = vmatprep.subr.bf16.mxu0 0
          %1313 = vmatpush1.bf16.msra.mxu0 0
          %1314 = vmatprep.subr.bf16.mxu0 0
          %1315 = vmatpush1.bf16.msra.mxu0 0
          %1316 = vmatprep.subr.bf16.mxu0 0
          %1317 = vmatpush1.bf16.msra.mxu0 0
          %1318 = vmatprep.subr.bf16.mxu0 0
          %1319 = vmatpush1.bf16.msra.mxu0 0
          %1320 = vmatprep.subr.bf16.mxu0 0
          %1321 = vmatpush1.bf16.msra.mxu0 0
          %1322 = vmatprep.mubr.bf16.mxu0 0
          %1323 = vmatmul.mubr.bf16.gmra.mrb[0].mxu0 %v1077
          %v1324 = vpop.f32.mrb[0].mxu0
          %v1325 = vadd.f32 %v1273, %v1324
          %v1326 = vpop.f32.mrb[0].mxu0
          %v1327 = vpop.f32.mrb[0].mxu0
          %v1328 = vpop.f32.mrb[0].mxu0
          %1329 = vdwg.mxu0
          %v1330 = vld [vmem:[#allocation9] sm:$0x1]
          %v1331 = vadd.f32 %v1325, %v1330
          %v1332 = vmax.f32 %v1331, 0.0
          %v1333 = vpack.c.bf16 %v1332, %v1332
          %v1334 = vld [vmem:[%s10] sm:$0xf]
          %v1335 = vld [vmem:[%s10 + $0x4] sm:$0xf]
          %v1336 = vld [vmem:[%s10 + $0x8] sm:$0xf]
          %v1337 = vld [vmem:[%s10 + $0xc] sm:$0xf]
          %v1338 = vld [vmem:[#allocation12] sm:$0xf]
          %v1339 = vld [vmem:[#allocation12 + $0x4] sm:$0xf]
          %v1340 = vld [vmem:[#allocation12 + $0x8] sm:$0xf]
          %v1341 = vld [vmem:[#allocation12 + $0xc] sm:$0xf]
          %v1346 = vunpack.c.l.b16 %v1338
          %v1347 = vunpack.c.l.b16 %v1339
          %v1348 = vunpack.c.l.b16 %v1340
          %v1349 = vunpack.c.l.b16 %v1341
          %v1350 = vpack.c.b16 %v1347, %v1346
          %v1351 = vpack.c.b16 %v1349, %v1348
          %1354 = vmatprep.subr.bf16.mxu0 0
          %1355 = vmatpush1.bf16.msra.mxu0 %v1350
          %1356 = vmatprep.subr.bf16.mxu0 0
          %1357 = vmatpush1.bf16.msra.mxu0 %v1351
          %1358 = vmatprep.subr.bf16.mxu0 0
          %1359 = vmatpush1.bf16.msra.mxu0 0
          %1360 = vmatprep.subr.bf16.mxu0 0
          %1361 = vmatpush1.bf16.msra.mxu0 0
          %1362 = vmatprep.subr.bf16.mxu0 0
          %1363 = vmatpush1.bf16.msra.mxu0 0
          %1364 = vmatprep.subr.bf16.mxu0 0
          %1365 = vmatpush1.bf16.msra.mxu0 0
          %1366 = vmatprep.subr.bf16.mxu0 0
          %1367 = vmatpush1.bf16.msra.mxu0 0
          %1368 = vmatprep.subr.bf16.mxu0 0
          %1369 = vmatpush1.bf16.msra.mxu0 0
          %1370 = vmatprep.subr.bf16.mxu0 0
          %1371 = vmatpush1.bf16.msra.mxu0 0
          %1372 = vmatprep.subr.bf16.mxu0 0
          %1373 = vmatpush1.bf16.msra.mxu0 0
          %1374 = vmatprep.subr.bf16.mxu0 0
          %1375 = vmatpush1.bf16.msra.mxu0 0
          %1376 = vmatprep.subr.bf16.mxu0 0
          %1377 = vmatpush1.bf16.msra.mxu0 0
          %1378 = vmatprep.subr.bf16.mxu0 0
          %1379 = vmatpush1.bf16.msra.mxu0 0
          %1380 = vmatprep.subr.bf16.mxu0 0
          %1381 = vmatpush1.bf16.msra.mxu0 0
          %1382 = vmatprep.subr.bf16.mxu0 0
          %1383 = vmatpush1.bf16.msra.mxu0 0
          %1384 = vmatprep.subr.bf16.mxu0 0
          %1385 = vmatpush1.bf16.msra.mxu0 0
          %1386 = vmatprep.mubr.bf16.mxu0 0
          %1387 = vmatmul.mubr.bf16.gmra.mrb[0].mxu0 %v1022
          %v1388 = vpop.f32.mrb[0].mxu0
          %v1389 = vadd.f32 0.0, %v1388
          %v1390 = vpop.f32.mrb[0].mxu0
          %v1391 = vpop.f32.mrb[0].mxu0
          %v1392 = vpop.f32.mrb[0].mxu0
          %1393 = vdwg.mxu0
          %v1398 = vunpack.c.l.b16 %v1334
          %v1399 = vunpack.c.l.b16 %v1335
          %v1400 = vunpack.c.l.b16 %v1336
          %v1401 = vunpack.c.l.b16 %v1337
          %v1402 = vpack.c.b16 %v1399, %v1398
          %v1403 = vpack.c.b16 %v1401, %v1400
          %v1407 = vsel %vm1020, %v1333, 0
          %1409 = vmatprep.subr.bf16.mxu0 0
          %1410 = vmatpush1.bf16.msra.mxu0 %v1402
          %1411 = vmatprep.subr.bf16.mxu0 0
          %1412 = vmatpush1.bf16.msra.mxu0 %v1403
          %1413 = vmatprep.subr.bf16.mxu0 0
          %1414 = vmatpush1.bf16.msra.mxu0 0
          %1415 = vmatprep.subr.bf16.mxu0 0
          %1416 = vmatpush1.bf16.msra.mxu0 0
          %1417 = vmatprep.subr.bf16.mxu0 0
          %1418 = vmatpush1.bf16.msra.mxu0 0
          %1419 = vmatprep.subr.bf16.mxu0 0
          %1420 = vmatpush1.bf16.msra.mxu0 0
          %1421 = vmatprep.subr.bf16.mxu0 0
          %1422 = vmatpush1.bf16.msra.mxu0 0
          %1423 = vmatprep.subr.bf16.mxu0 0
          %1424 = vmatpush1.bf16.msra.mxu0 0
          %1425 = vmatprep.subr.bf16.mxu0 0
          %1426 = vmatpush1.bf16.msra.mxu0 0
          %1427 = vmatprep.subr.bf16.mxu0 0
          %1428 = vmatpush1.bf16.msra.mxu0 0
          %1429 = vmatprep.subr.bf16.mxu0 0
          %1430 = vmatpush1.bf16.msra.mxu0 0
          %1431 = vmatprep.subr.bf16.mxu0 0
          %1432 = vmatpush1.bf16.msra.mxu0 0
          %1433 = vmatprep.subr.bf16.mxu0 0
          %1434 = vmatpush1.bf16.msra.mxu0 0
          %1435 = vmatprep.subr.bf16.mxu0 0
          %1436 = vmatpush1.bf16.msra.mxu0 0
          %1437 = vmatprep.subr.bf16.mxu0 0
          %1438 = vmatpush1.bf16.msra.mxu0 0
          %1439 = vmatprep.subr.bf16.mxu0 0
          %1440 = vmatpush1.bf16.msra.mxu0 0
          %1441 = vmatprep.mubr.bf16.mxu0 0
          %1442 = vmatmul.mubr.bf16.gmra.mrb[0].mxu0 %v1407
          %v1443 = vpop.f32.mrb[0].mxu0
          %v1444 = vadd.f32 %v1389, %v1443
          %v1445 = vpop.f32.mrb[0].mxu0
          %v1446 = vpop.f32.mrb[0].mxu0
          %v1447 = vpop.f32.mrb[0].mxu0
          %1448 = vdwg.mxu0
          %v1449 = vld [vmem:[%s16] sm:$0x1]
          %v1450 = vadd.f32 %v1444, %v1449
          %v1451 = vxor.u32 %v1450, 2147483648
          %v1452 = vmul.f32 %v1451, 1.442695
          %v1453 = vpow.pop %v1452
          %v1454 = vadd.f32 %v1453, 1.0
          %v1455 = vrcp.pop %v1454
          %v1456 = vmul.f32 1.0, %v1455
          %v1457 = vld [vmem:[%s11] sm:$0xf]
          %v1458 = vld [vmem:[%s11 + $0x4] sm:$0xf]
          %v1459 = vld [vmem:[%s11 + $0x8] sm:$0xf]
          %v1460 = vld [vmem:[%s11 + $0xc] sm:$0xf]
          %v1461 = vld [vmem:[#allocation13] sm:$0xf]
          %v1462 = vld [vmem:[#allocation13 + $0x4] sm:$0xf]
          %v1463 = vld [vmem:[#allocation13 + $0x8] sm:$0xf]
          %v1464 = vld [vmem:[#allocation13 + $0xc] sm:$0xf]
          %v1469 = vunpack.c.l.b16 %v1461
          %v1470 = vunpack.c.l.b16 %v1462
          %v1471 = vunpack.c.l.b16 %v1463
          %v1472 = vunpack.c.l.b16 %v1464
          %v1473 = vpack.c.b16 %v1470, %v1469
          %v1474 = vpack.c.b16 %v1472, %v1471
          %1477 = vmatprep.subr.bf16.mxu0 0
          %1478 = vmatpush1.bf16.msra.mxu0 %v1473
          %1479 = vmatprep.subr.bf16.mxu0 0
          %1480 = vmatpush1.bf16.msra.mxu0 %v1474
          %1481 = vmatprep.subr.bf16.mxu0 0
          %1482 = vmatpush1.bf16.msra.mxu0 0
          %1483 = vmatprep.subr.bf16.mxu0 0
          %1484 = vmatpush1.bf16.msra.mxu0 0
          %1485 = vmatprep.subr.bf16.mxu0 0
          %1486 = vmatpush1.bf16.msra.mxu0 0
          %1487 = vmatprep.subr.bf16.mxu0 0
          %1488 = vmatpush1.bf16.msra.mxu0 0
          %1489 = vmatprep.subr.bf16.mxu0 0
          %1490 = vmatpush1.bf16.msra.mxu0 0
          %1491 = vmatprep.subr.bf16.mxu0 0
          %1492 = vmatpush1.bf16.msra.mxu0 0
          %1493 = vmatprep.subr.bf16.mxu0 0
          %1494 = vmatpush1.bf16.msra.mxu0 0
          %1495 = vmatprep.subr.bf16.mxu0 0
          %1496 = vmatpush1.bf16.msra.mxu0 0
          %1497 = vmatprep.subr.bf16.mxu0 0
          %1498 = vmatpush1.bf16.msra.mxu0 0
          %1499 = vmatprep.subr.bf16.mxu0 0
          %1500 = vmatpush1.bf16.msra.mxu0 0
          %1501 = vmatprep.subr.bf16.mxu0 0
          %1502 = vmatpush1.bf16.msra.mxu0 0
          %1503 = vmatprep.subr.bf16.mxu0 0
          %1504 = vmatpush1.bf16.msra.mxu0 0
          %1505 = vmatprep.subr.bf16.mxu0 0
          %1506 = vmatpush1.bf16.msra.mxu0 0
          %1507 = vmatprep.subr.bf16.mxu0 0
          %1508 = vmatpush1.bf16.msra.mxu0 0
          %1509 = vmatprep.mubr.bf16.mxu0 0
          %1510 = vmatmul.mubr.bf16.gmra.mrb[0].mxu0 %v1022
          %v1511 = vpop.f32.mrb[0].mxu0
          %v1512 = vadd.f32 0.0, %v1511
          %v1513 = vpop.f32.mrb[0].mxu0
          %v1514 = vpop.f32.mrb[0].mxu0
          %v1515 = vpop.f32.mrb[0].mxu0
          %1516 = vdwg.mxu0
          %v1521 = vunpack.c.l.b16 %v1457
          %v1522 = vunpack.c.l.b16 %v1458
          %v1523 = vunpack.c.l.b16 %v1459
          %v1524 = vunpack.c.l.b16 %v1460
          %v1525 = vpack.c.b16 %v1522, %v1521
          %v1526 = vpack.c.b16 %v1524, %v1523
          %1529 = vmatprep.subr.bf16.mxu0 0
          %1530 = vmatpush1.bf16.msra.mxu0 %v1525
          %1531 = vmatprep.subr.bf16.mxu0 0
          %1532 = vmatpush1.bf16.msra.mxu0 %v1526
          %1533 = vmatprep.subr.bf16.mxu0 0
          %1534 = vmatpush1.bf16.msra.mxu0 0
          %1535 = vmatprep.subr.bf16.mxu0 0
          %1536 = vmatpush1.bf16.msra.mxu0 0
          %1537 = vmatprep.subr.bf16.mxu0 0
          %1538 = vmatpush1.bf16.msra.mxu0 0
          %1539 = vmatprep.subr.bf16.mxu0 0
          %1540 = vmatpush1.bf16.msra.mxu0 0
          %1541 = vmatprep.subr.bf16.mxu0 0
          %1542 = vmatpush1.bf16.msra.mxu0 0
          %1543 = vmatprep.subr.bf16.mxu0 0
          %1544 = vmatpush1.bf16.msra.mxu0 0
          %1545 = vmatprep.subr.bf16.mxu0 0
          %1546 = vmatpush1.bf16.msra.mxu0 0
          %1547 = vmatprep.subr.bf16.mxu0 0
          %1548 = vmatpush1.bf16.msra.mxu0 0
          %1549 = vmatprep.subr.bf16.mxu0 0
          %1550 = vmatpush1.bf16.msra.mxu0 0
          %1551 = vmatprep.subr.bf16.mxu0 0
          %1552 = vmatpush1.bf16.msra.mxu0 0
          %1553 = vmatprep.subr.bf16.mxu0 0
          %1554 = vmatpush1.bf16.msra.mxu0 0
          %1555 = vmatprep.subr.bf16.mxu0 0
          %1556 = vmatpush1.bf16.msra.mxu0 0
          %1557 = vmatprep.subr.bf16.mxu0 0
          %1558 = vmatpush1.bf16.msra.mxu0 0
          %1559 = vmatprep.subr.bf16.mxu0 0
          %1560 = vmatpush1.bf16.msra.mxu0 0
          %1561 = vmatprep.mubr.bf16.mxu0 0
          %1562 = vmatmul.mubr.bf16.gmra.mrb[0].mxu0 %v1407
          %v1563 = vpop.f32.mrb[0].mxu0
          %v1564 = vadd.f32 %v1512, %v1563
          %v1565 = vpop.f32.mrb[0].mxu0
          %v1566 = vpop.f32.mrb[0].mxu0
          %v1567 = vpop.f32.mrb[0].mxu0
          %1568 = vdwg.mxu0
          %v1569 = vld [vmem:[%s17] sm:$0x1]
          %v1570 = vadd.f32 %v1564, %v1569
          %v1571 = vxor.u32 %v1570, 2147483648
          %v1572 = vmul.f32 %v1571, 1.442695
          %v1573 = vpow.pop %v1572
          %v1574 = vadd.f32 %v1573, 1.0
          %v1575 = vrcp.pop %v1574
          %v1576 = vmul.f32 1.0, %v1575
          %v1577 = vld [vmem:[#allocation10] sm:$0xf]
          %v1578 = vld [vmem:[#allocation10 + $0x4] sm:$0xf]
          %v1579 = vld [vmem:[#allocation10 + $0x8] sm:$0xf]
          %v1580 = vld [vmem:[#allocation10 + $0xc] sm:$0xf]
          %v1581 = vld [vmem:[%s18] sm:$0x1]
          %v1586 = vunpack.c.l.b16 %v1577
          %v1587 = vunpack.c.l.b16 %v1578
          %v1588 = vunpack.c.l.b16 %v1579
          %v1589 = vunpack.c.l.b16 %v1580
          %v1590 = vpack.c.b16 %v1587, %v1586
          %v1591 = vpack.c.b16 %v1589, %v1588
          %1594 = vmatprep.subr.bf16.mxu0 0
          %1595 = vmatpush1.bf16.msra.mxu0 %v1590
          %1596 = vmatprep.subr.bf16.mxu0 0
          %1597 = vmatpush1.bf16.msra.mxu0 %v1591
          %1598 = vmatprep.subr.bf16.mxu0 0
          %1599 = vmatpush1.bf16.msra.mxu0 0
          %1600 = vmatprep.subr.bf16.mxu0 0
          %1601 = vmatpush1.bf16.msra.mxu0 0
          %1602 = vmatprep.subr.bf16.mxu0 0
          %1603 = vmatpush1.bf16.msra.mxu0 0
          %1604 = vmatprep.subr.bf16.mxu0 0
          %1605 = vmatpush1.bf16.msra.mxu0 0
          %1606 = vmatprep.subr.bf16.mxu0 0
          %1607 = vmatpush1.bf16.msra.mxu0 0
          %1608 = vmatprep.subr.bf16.mxu0 0
          %1609 = vmatpush1.bf16.msra.mxu0 0
          %1610 = vmatprep.subr.bf16.mxu0 0
          %1611 = vmatpush1.bf16.msra.mxu0 0
          %1612 = vmatprep.subr.bf16.mxu0 0
          %1613 = vmatpush1.bf16.msra.mxu0 0
          %1614 = vmatprep.subr.bf16.mxu0 0
          %1615 = vmatpush1.bf16.msra.mxu0 0
          %1616 = vmatprep.subr.bf16.mxu0 0
          %1617 = vmatpush1.bf16.msra.mxu0 0
          %1618 = vmatprep.subr.bf16.mxu0 0
          %1619 = vmatpush1.bf16.msra.mxu0 0
          %1620 = vmatprep.subr.bf16.mxu0 0
          %1621 = vmatpush1.bf16.msra.mxu0 0
          %1622 = vmatprep.subr.bf16.mxu0 0
          %1623 = vmatpush1.bf16.msra.mxu0 0
          %1624 = vmatprep.subr.bf16.mxu0 0
          %1625 = vmatpush1.bf16.msra.mxu0 0
          %1626 = vmatprep.mubr.bf16.mxu0 0
          %1627 = vmatmul.mubr.bf16.gmra.mrb[0].mxu0 %v1407
          %v1628 = vpop.f32.mrb[0].mxu0
          %v1629 = vadd.f32 %v1581, %v1628
          %v1630 = vpop.f32.mrb[0].mxu0
          %v1631 = vpop.f32.mrb[0].mxu0
          %v1632 = vpop.f32.mrb[0].mxu0
          %1633 = vdwg.mxu0
          %v1634 = vld [vmem:[%s15] sm:$0xf]
          %v1635 = vld [vmem:[%s15 + $0x4] sm:$0xf]
          %v1636 = vld [vmem:[%s15 + $0x8] sm:$0xf]
          %v1637 = vld [vmem:[%s15 + $0xc] sm:$0xf]
          %v1638 = vld [vmem:[%s19] sm:$0x1]
          %v1643 = vunpack.c.l.b16 %v1634
          %v1644 = vunpack.c.l.b16 %v1635
          %v1645 = vunpack.c.l.b16 %v1636
          %v1646 = vunpack.c.l.b16 %v1637
          %v1647 = vpack.c.b16 %v1644, %v1643
          %v1648 = vpack.c.b16 %v1646, %v1645
          %1651 = vmatprep.subr.bf16.mxu0 0
          %1652 = vmatpush1.bf16.msra.mxu0 %v1647
          %1653 = vmatprep.subr.bf16.mxu0 0
          %1654 = vmatpush1.bf16.msra.mxu0 %v1648
          %1655 = vmatprep.subr.bf16.mxu0 0
          %1656 = vmatpush1.bf16.msra.mxu0 0
          %1657 = vmatprep.subr.bf16.mxu0 0
          %1658 = vmatpush1.bf16.msra.mxu0 0
          %1659 = vmatprep.subr.bf16.mxu0 0
          %1660 = vmatpush1.bf16.msra.mxu0 0
          %1661 = vmatprep.subr.bf16.mxu0 0
          %1662 = vmatpush1.bf16.msra.mxu0 0
          %1663 = vmatprep.subr.bf16.mxu0 0
          %1664 = vmatpush1.bf16.msra.mxu0 0
          %1665 = vmatprep.subr.bf16.mxu0 0
          %1666 = vmatpush1.bf16.msra.mxu0 0
          %1667 = vmatprep.subr.bf16.mxu0 0
          %1668 = vmatpush1.bf16.msra.mxu0 0
          %1669 = vmatprep.subr.bf16.mxu0 0
          %1670 = vmatpush1.bf16.msra.mxu0 0
          %1671 = vmatprep.subr.bf16.mxu0 0
          %1672 = vmatpush1.bf16.msra.mxu0 0
          %1673 = vmatprep.subr.bf16.mxu0 0
          %1674 = vmatpush1.bf16.msra.mxu0 0
          %1675 = vmatprep.subr.bf16.mxu0 0
          %1676 = vmatpush1.bf16.msra.mxu0 0
          %1677 = vmatprep.subr.bf16.mxu0 0
          %1678 = vmatpush1.bf16.msra.mxu0 0
          %1679 = vmatprep.subr.bf16.mxu0 0
          %1680 = vmatpush1.bf16.msra.mxu0 0
          %1681 = vmatprep.subr.bf16.mxu0 0
          %1682 = vmatpush1.bf16.msra.mxu0 0
          %1683 = vmatprep.mubr.bf16.mxu0 0
          %1684 = vmatmul.mubr.bf16.gmra.mrb[0].mxu0 %v1022
          %v1685 = vpop.f32.mrb[0].mxu0
          %v1686 = vadd.f32 %v1638, %v1685
          %v1687 = vpop.f32.mrb[0].mxu0
          %v1688 = vpop.f32.mrb[0].mxu0
          %v1689 = vpop.f32.mrb[0].mxu0
          %1690 = vdwg.mxu0
          %v1691 = vmul.f32 %v1456, %v1686
          %v1692 = vadd.f32 %v1629, %v1691
          %v1693 = vtanh.pop %v1692
          %v1694 = vsub.f32 1.0, %v1576
          %v1695 = vmul.f32 %v1694, %v1693
          %v1696 = vmul.f32 %v1576, %v998
          %v1697 = vadd.f32 %v1695, %v1696
          %vm1698 = vcmask 253952
          %1699 = vst.msk [vmem:[%s957] sm:$0x1] %vm1698, %v1697
          %vm1700 = vcmask 0
          %1701 = vst.msk [vmem:[%s988] sm:$0x1] %vm1700, -1e+30
          %1702 = vst.msk [vmem:[%s991] sm:$0x1] %vm1700, 0.0
        $region173: #{tpu_custom_call.1} parent=140 // pred_fallthru
          _
        %v1703 = vld [vmem:[%s957] sm:$0x1]
        %v1704 = vpack.c.bf16 %v1703, %v1703
        %v1705 = vld [vmem:[%s888] sm:$0xf]
        %v1706 = vld [vmem:[%s888 + $0x4] sm:$0xf]
        %v1707 = vld [vmem:[%s888 + $0x8] sm:$0xf]
        %v1708 = vld [vmem:[%s888 + $0xc] sm:$0xf]
        %v1709 = vld [vmem:[%s983] sm:$0x1]
        %v1714 = vunpack.c.l.b16 %v1705
        %v1715 = vunpack.c.l.b16 %v1706
        %v1716 = vunpack.c.l.b16 %v1707
        %v1717 = vunpack.c.l.b16 %v1708
        %v1718 = vpack.c.b16 %v1715, %v1714
        %v1719 = vpack.c.b16 %v1717, %v1716
        %vm1722 = vcmask 261120
        %v1724 = vsel %vm1722, %v1704, 0
        %1726 = vmatprep.subr.bf16.mxu0 0
        %1727 = vmatpush1.bf16.msra.mxu0 %v1718
        %1728 = vmatprep.subr.bf16.mxu0 0
        %1729 = vmatpush1.bf16.msra.mxu0 %v1719
        %1730 = vmatprep.subr.bf16.mxu0 0
        %1731 = vmatpush1.bf16.msra.mxu0 0
        %1732 = vmatprep.subr.bf16.mxu0 0
        %1733 = vmatpush1.bf16.msra.mxu0 0
        %1734 = vmatprep.subr.bf16.mxu0 0
        %1735 = vmatpush1.bf16.msra.mxu0 0
        %1736 = vmatprep.subr.bf16.mxu0 0
        %1737 = vmatpush1.bf16.msra.mxu0 0
        %1738 = vmatprep.subr.bf16.mxu0 0
        %1739 = vmatpush1.bf16.msra.mxu0 0
        %1740 = vmatprep.subr.bf16.mxu0 0
        %1741 = vmatpush1.bf16.msra.mxu0 0
        %1742 = vmatprep.subr.bf16.mxu0 0
        %1743 = vmatpush1.bf16.msra.mxu0 0
        %1744 = vmatprep.subr.bf16.mxu0 0
        %1745 = vmatpush1.bf16.msra.mxu0 0
        %1746 = vmatprep.subr.bf16.mxu0 0
        %1747 = vmatpush1.bf16.msra.mxu0 0
        %1748 = vmatprep.subr.bf16.mxu0 0
        %1749 = vmatpush1.bf16.msra.mxu0 0
        %1750 = vmatprep.subr.bf16.mxu0 0
        %1751 = vmatpush1.bf16.msra.mxu0 0
        %1752 = vmatprep.subr.bf16.mxu0 0
        %1753 = vmatpush1.bf16.msra.mxu0 0
        %1754 = vmatprep.subr.bf16.mxu0 0
        %1755 = vmatpush1.bf16.msra.mxu0 0
        %1756 = vmatprep.subr.bf16.mxu0 0
        %1757 = vmatpush1.bf16.msra.mxu0 0
        %1758 = vmatprep.mubr.bf16.mxu0 0
        %1759 = vmatmul.mubr.bf16.gmra.mrb[0].mxu0 %v1724
        %v1760 = vpop.f32.mrb[0].mxu0
        %v1761 = vadd.f32 %v1709, %v1760
        %v1762 = vpop.f32.mrb[0].mxu0
        %v1763 = vpop.f32.mrb[0].mxu0
        %v1764 = vpop.f32.mrb[0].mxu0
        %1765 = vdwg.mxu0
        %1766 = vst [vmem:[%s951] sm:$0x1] %v1761
        %s1767 = sadd.s32 %s53, %s54
        %p1768 = scmp.lt.s32.totalorder %s1767, 0
        // Predicated region
        $region174: #{tpu_custom_call.1} parent=140 // pred_check
          %p1769 = pneg %p1768
        $region175: #{tpu_custom_call.1} parent=140 // pred_check_branch
          %1771 = sbr.rel (%p1769) target = $region177
        $region176: #{tpu_custom_call.1} parent=140 // pred_region
          %v1772 = vld [vmem:[%s988] sm:$0x1]
          %vm1773 = vcmask 1040384
          %v1774 = vsel %vm1773, %v1761, -inf
          %1775 = vmax.xlane.f32.xlu0 %v1774
          %v1776 = vpop.xlane.xlu0 %1775
          %v1777 = vmax.f32 %v1772, %v1776
          %v1778 = vld [vmem:[%s991] sm:$0x1]
          %v1779 = vsub.f32 %v1772, %v1777
          %v1780 = vmul.f32 %v1779, 1.442695
          %v1781 = vpow.pop %v1780
          %v1782 = vmul.f32 %v1778, %v1781
          %1784 = vset.pattern.permute.xlu0 0
          %1785 = vperm.xlu0 %1784, %v1777
          %v1786 = vpop.permute.xlu0 %1785
          %v1788 = vlaneseq
          %v1789 = vshrl.u32 %v1788, 7
          %v1790 = vsub.s32 0, %v1789
          %v1791 = vrot.slane %v1786, %v1790
          %v1792 = vsub.f32 %v1761, %v1791
          %v1793 = vmul.f32 %v1792, 1.442695
          %v1794 = vpow.pop %v1793
          %v1795 = vsel %vm1773, %v1794, 0.0
          %1796 = vadd.xlane.f32.xlu0 %v1795
          %v1797 = vpop.xlane.xlu0 %1796
          %v1798 = vadd.f32 %v1782, %v1797
          %vm1799 = vcmask 0
          %1800 = vst.msk [vmem:[%s991] sm:$0x1] %vm1799, %v1798
          %1801 = vst.msk [vmem:[%s988] sm:$0x1] %vm1799, %v1777
        $region177: #{tpu_custom_call.1} parent=140 // pred_fallthru
          _
        %p1802 = scmp.ge.s32.totalorder %s1767, 0
        // Predicated region
        $region178: #{tpu_custom_call.1} parent=140 // pred_check
          %p1803 = pneg %p1802
        $region179: #{tpu_custom_call.1} parent=140 // pred_check_branch
          %1805 = sbr.rel (%p1803) target = $region181
        $region180: #{tpu_custom_call.1} parent=140 // pred_region
          %s1806 = smul.u32 %s1767, 128
          %v1807 = vlaneseq
          %v1808 = vand.u32 %v1807, 127
          %v1809 = vstv %s1806
          %v1810 = vadd.s32 %v1809, %v1808
          %vm1811 = vcmp.lt.s32.totalorder %v1810, 16
          %v1812 = vsel %vm1811, %v1761, -1e+30
          %v1813 = vld [vmem:[%s988] sm:$0x1]
          %vm1814 = vcmask 1040384
          %v1815 = vsel %vm1814, %v1812, -inf
          %1816 = vmax.xlane.f32.xlu0 %v1815
          %v1817 = vpop.xlane.xlu0 %1816
          %v1818 = vmax.f32 %v1813, %v1817
          %v1819 = vld [vmem:[%s991] sm:$0x1]
          %v1820 = vsub.f32 %v1813, %v1818
          %v1821 = vmul.f32 %v1820, 1.442695
          %v1822 = vpow.pop %v1821
          %v1823 = vmul.f32 %v1819, %v1822
          %1825 = vset.pattern.permute.xlu0 0
          %1826 = vperm.xlu0 %1825, %v1818
          %v1827 = vpop.permute.xlu0 %1826
          %v1829 = vlaneseq
          %v1830 = vshrl.u32 %v1829, 7
          %v1831 = vsub.s32 0, %v1830
          %v1832 = vrot.slane %v1827, %v1831
          %v1833 = vsub.f32 %v1812, %v1832
          %v1834 = vmul.f32 %v1833, 1.442695
          %v1835 = vpow.pop %v1834
          %v1836 = vsel %vm1814, %v1835, 0.0
          %1837 = vadd.xlane.f32.xlu0 %v1836
          %v1838 = vpop.xlane.xlu0 %1837
          %v1839 = vadd.f32 %v1823, %v1838
          %vm1840 = vcmask 0
          %1841 = vst.msk [vmem:[%s991] sm:$0x1] %vm1840, %v1839
          %1842 = vst.msk [vmem:[%s988] sm:$0x1] %vm1840, %v1818
        $region181: #{tpu_custom_call.1} parent=140 // pred_fallthru
          _
        %s1843 = sand.u32 %s533, 1
        %s1844 = scalar_lea.sflag [#allocation6], %s1843
        %s1845 = sand.u32 %s533, 1
        %s1846 = scalar_lea.vmem [#allocation16], %s1845
        %s1847 = sand.u32 %s49, 1
        %s1848 = scalar_lea.sflag [#allocation18], %s1847
        %s1849 = sand.u32 %s559, 1
        %s1850 = scalar_lea.vmem [#allocation17], %s1849
        %s1851 = sand.u32 %s49, 1
        %s1852 = scalar_lea.sflag [#allocation18], %s1851
        %s1853 = sand.u32 %s585, 1
        %s1854 = scalar_lea.vmem [#allocation19], %s1853
        %p1855 = scmp.lt.s32.totalorder %s53, 1
        %s1856 = scalar_select %p1855, %s53, 1
        %s1857 = scalar_lea.vmem %s25, %s1856
        %p1858 = scmp.lt.s32.totalorder %s53, 1
        %s1859 = scalar_select %p1858, %s53, 1
        %s1860 = scalar_lea.vmem %s26, %s1859
        // Predicated region
        $region182: #{tpu_custom_call.1} parent=140 // pred_check
          %p1861 = pneg %p543
        $region183: #{tpu_custom_call.1} parent=140 // pred_check_branch
          %1863 = sbr.rel (%p1861) target = $region185
        $region184: #{tpu_custom_call.1} parent=140 // pred_region
          %s1864 = sadd.s32 %s53, %s54
          %s1866 = ssub.s32 16, 16
          %1867 = vsyncadd %s1844, %s1866
          %s1868 = smul.addr %s1864, 16
          %s1869 = scalar_lea.hbm %s22, %s1868
          %s1871 = sshll.u32 %s1846, 4
          %s1872 = int_to_ptr.vmem [resolvable:$true] %s1871
          %1874 = dma.vmem_to_hbm [thread:$0]  %s1872, 16, %s1869, %s1844
        $region185: #{tpu_custom_call.1} parent=140 // pred_fallthru
          _
        // Predicated region
        $region186: #{tpu_custom_call.1} parent=140 // pred_check
          %p1875 = pneg %p569
        $region187: #{tpu_custom_call.1} parent=140 // pred_check_branch
          %1877 = sbr.rel (%p1875) target = $region189
        $region188: #{tpu_custom_call.1} parent=140 // pred_region
          %s1879 = ssub.s32 16, 16
          %1880 = vsyncadd %s1848, %s1879
          %s1881 = smul.addr %s53, 16
          %s1882 = scalar_lea.hbm %s23, %s1881
          %s1884 = sshll.u32 %s1850, 4
          %s1885 = int_to_ptr.vmem [resolvable:$true] %s1884
          %1887 = dma.vmem_to_hbm [thread:$0]  %s1885, 16, %s1882, %s1848
        $region189: #{tpu_custom_call.1} parent=140 // pred_fallthru
          _
        // Predicated region
        $region190: #{tpu_custom_call.1} parent=140 // pred_check
          %p1888 = pneg %p595
        $region191: #{tpu_custom_call.1} parent=140 // pred_check_branch
          %1890 = sbr.rel (%p1888) target = $region193
        $region192: #{tpu_custom_call.1} parent=140 // pred_region
          %s1892 = ssub.s32 16, 16
          %1893 = vsyncadd %s1852, %s1892
          %s1894 = smul.addr %s53, 16
          %s1895 = scalar_lea.hbm %s24, %s1894
          %s1897 = sshll.u32 %s1854, 4
          %s1898 = int_to_ptr.vmem [resolvable:$true] %s1897
          %1900 = dma.vmem_to_hbm [thread:$0]  %s1898, 16, %s1895, %s1852
        $region193: #{tpu_custom_call.1} parent=140 // pred_fallthru
          _
        // Predicated region
        $region194: #{tpu_custom_call.1} parent=140 // pred_check
          %p1901 = pneg %p621
        $region195: #{tpu_custom_call.1} parent=140 // pred_check_branch
          %1903 = sbr.rel (%p1901) target = $region197
        $region196: #{tpu_custom_call.1} parent=140 // pred_region
          _
        $region197: #{tpu_custom_call.1} parent=140 // pred_fallthru
          _
        // Predicated region
        $region198: #{tpu_custom_call.1} parent=140 // pred_check
          %p1904 = pneg %p647
        $region199: #{tpu_custom_call.1} parent=140 // pred_check_branch
          %1906 = sbr.rel (%p1904) target = $region201
        $region200: #{tpu_custom_call.1} parent=140 // pred_region
          _
        $region201: #{tpu_custom_call.1} parent=140 // pred_fallthru
          _
      $region141: #{tpu_custom_call.1} parent=5 // pred_fallthru
        _
      %p1907 = scmp.le.s32.totalorder 2, %s44
      // Predicated region
      $region202: #{tpu_custom_call.1} parent=5 // pred_check
        %p1908 = pneg %p1907
      $region203: #{tpu_custom_call.1} parent=5 // pred_check_branch
        %1910 = sbr.rel (%p1908) target = $region205
      $region204: #{tpu_custom_call.1} parent=5 // pred_region
        %s1911 = ssub.s32 %s44, 2
        // Predicated region
        $region206: #{tpu_custom_call.1} parent=204 // pred_check
          %p1912 = pneg %p549
        $region207: #{tpu_custom_call.1} parent=204 // pred_check_branch
          %1914 = sbr.rel (%p1912) target = $region209
        $region208: #{tpu_custom_call.1} parent=204 // pred_region
          %s1915 = sand.u32 %s534, 1
          %s1916 = scalar_lea.sflag [#allocation6], %s1915
          %s1917 = sand.u32 %s534, 1
          %s1918 = scalar_lea.vmem [#allocation16], %s1917
          %1919 = dma.done %s1916, 16
        $region209: #{tpu_custom_call.1} parent=204 // pred_fallthru
          _
        // Predicated region
        $region210: #{tpu_custom_call.1} parent=204 // pred_check
          %p1920 = pneg %p575
        $region211: #{tpu_custom_call.1} parent=204 // pred_check_branch
          %1922 = sbr.rel (%p1920) target = $region213
        $region212: #{tpu_custom_call.1} parent=204 // pred_region
          %s1923 = sand.u32 %s50, 1
          %s1924 = scalar_lea.sflag [#allocation18], %s1923
          %s1925 = sand.u32 %s560, 1
          %s1926 = scalar_lea.vmem [#allocation17], %s1925
          %1927 = dma.done %s1924, 16
        $region213: #{tpu_custom_call.1} parent=204 // pred_fallthru
          _
        // Predicated region
        $region214: #{tpu_custom_call.1} parent=204 // pred_check
          %p1928 = pneg %p601
        $region215: #{tpu_custom_call.1} parent=204 // pred_check_branch
          %1930 = sbr.rel (%p1928) target = $region217
        $region216: #{tpu_custom_call.1} parent=204 // pred_region
          %s1931 = sand.u32 %s50, 1
          %s1932 = scalar_lea.sflag [#allocation18], %s1931
          %s1933 = sand.u32 %s586, 1
          %s1934 = scalar_lea.vmem [#allocation19], %s1933
          %1935 = dma.done %s1932, 16
        $region217: #{tpu_custom_call.1} parent=204 // pred_fallthru
          _
        // Predicated region
        $region218: #{tpu_custom_call.1} parent=204 // pred_check
          %p1936 = pneg %p627
        $region219: #{tpu_custom_call.1} parent=204 // pred_check_branch
          %1938 = sbr.rel (%p1936) target = $region221
        $region220: #{tpu_custom_call.1} parent=204 // pred_region
          %p1939 = scmp.lt.s32.totalorder %s55, 1
          %s1940 = scalar_select %p1939, %s55, 1
          %s1941 = scalar_lea.vmem %s25, %s1940
        $region221: #{tpu_custom_call.1} parent=204 // pred_fallthru
          _
        // Predicated region
        $region222: #{tpu_custom_call.1} parent=204 // pred_check
          %p1942 = pneg %p653
        $region223: #{tpu_custom_call.1} parent=204 // pred_check_branch
          %1944 = sbr.rel (%p1942) target = $region225
        $region224: #{tpu_custom_call.1} parent=204 // pred_region
          %p1945 = scmp.lt.s32.totalorder %s55, 1
          %s1946 = scalar_select %p1945, %s55, 1
          %s1947 = scalar_lea.vmem %s26, %s1946
        $region225: #{tpu_custom_call.1} parent=204 // pred_fallthru
          _
      $region205: #{tpu_custom_call.1} parent=5 // pred_fallthru
        _
    $region6: #{tpu_custom_call.1} parent=1 // loop_footer
      %s48 = sadd.s32 1, %s44
    $region7: #{tpu_custom_call.1} parent=1 // loop_footer_branch
      %43 = sbr.rel target = $region3
    $region8: #{tpu_custom_call.1} parent=1 // loop_exit
      _
    %1948 = vsyncpa [#allocation5], 1
    %s1949 = scalar_lea.sflag [#allocation5], 1
    %1950 = vsyncpa %s1949, 1
    %1951 = vsyncpa [#allocation8], 1
    %1952 = vsyncpa [#allocation11], 1
    %1953 = vsyncpa [#allocation14], 1
    %1954 = vsyncpa [#allocation6], 1
    %s1955 = scalar_lea.sflag [#allocation6], 1
    %1956 = vsyncpa %s1955, 1
    %1957 = vsyncpa [#allocation18], 1
    %s1958 = scalar_lea.sflag [#allocation18], 1
    %1959 = vsyncpa %s1958, 1

</llo_original>
